<compile_context>
chip_gen: v7x
topology: tpu7x:2x2x1
jax: 0.10.0
libtpu: 0.0.40
codegen_flags: <defaults>
</compile_context>

<pallas_src>
import jax
import jax.numpy as jnp
from jax.experimental import pallas as pl
from jax.experimental.pallas import tpu as pltpu

D_IN = 28 * 28          # 784
H1, H1_PAD = 500, 512   # fc1 width, padded to a multiple of 128
H2 = 256                # fc2 width (already lane-aligned)
OUT, OUT_PAD = 10, 128  # logits width, padded lane-dense
NEG = -1e30             # finite "minus infinity" for padded logit lanes (no NaN)


def _round_up(n, m):
    return ((n + m - 1) // m) * m


def mlp_kernel(x_ref, w1_ref, b1_ref, w2_ref, b2_ref, w3_ref, b3_ref, o_ref):
    # x tile: (TB, 784) bf16; weights bf16 (VMEM-resident); biases f32.
    x = x_ref[...]

    # fc1 + ReLU  (MXU bf16 matmul, f32 accumulation; elementwise in f32)
    h1 = jnp.dot(x, w1_ref[...], preferred_element_type=jnp.float32) + b1_ref[...]
    h1 = jnp.maximum(h1, 0.0).astype(jnp.bfloat16)          # (TB, 512)

    # fc2 + ReLU
    h2 = jnp.dot(h1, w2_ref[...], preferred_element_type=jnp.float32) + b2_ref[...]
    h2 = jnp.maximum(h2, 0.0).astype(jnp.bfloat16)          # (TB, 256)

    # fc3 -> lane-dense (TB, 128) logits; padded lanes carry bias == NEG.
    logits = jnp.dot(h2, w3_ref[...], preferred_element_type=jnp.float32) + b3_ref[...]

    # Numerically-stable log_softmax along the last axis (padded lanes exp -> 0).
    m = jnp.max(logits, axis=-1, keepdims=True)
    z = logits - m
    lse = jnp.log(jnp.sum(jnp.exp(z), axis=-1, keepdims=True))
    o_ref[...] = z - lse


def net_forward(x, params, *, max_tile=256):
    """x: any shape reshapeable to (-1, 784). Returns (B, 10) f32 log-probs."""
    w1, b1, w2, b2, w3, b3 = params
    x2d = x.reshape(-1, D_IN).astype(jnp.float32)
    B = x2d.shape[0]

    # Batch tile: MXU-friendly 256 rows when the batch is big enough; for tiny
    # batches a single tile rounded up to a bf16-sublane-friendly multiple of 16.
    TB = min(max_tile, _round_up(B, 16))
    B_pad = _round_up(B, TB)
    if B_pad != B:
        x2d = jnp.pad(x2d, ((0, B_pad - B), (0, 0)))
    xk = x2d.astype(jnp.bfloat16)

    # Pad weights/biases to aligned widths; weights cast to bf16 for the MXU.
    w1p = jnp.pad(w1, ((0, 0), (0, H1_PAD - H1))).astype(jnp.bfloat16)    # (784, 512)
    b1p = jnp.pad(b1, ((0, 0), (0, H1_PAD - H1)))                         # (1, 512)
    w2p = jnp.pad(w2, ((0, H1_PAD - H1), (0, 0))).astype(jnp.bfloat16)    # (512, 256)
    b2p = b2                                                              # (1, 256)
    w3p = jnp.pad(w3, ((0, 0), (0, OUT_PAD - OUT))).astype(jnp.bfloat16)  # (256, 128)
    b3p = jnp.pad(b3, ((0, 0), (0, OUT_PAD - OUT)), constant_values=NEG)  # (1, 128)

    grid = (pl.cdiv(B_pad, TB),)

    flops = 2 * B_pad * (D_IN * H1_PAD + H1_PAD * H2 + H2 * OUT_PAD)
    transcendentals = B_pad * (OUT_PAD + 1)  # exp per logit lane + log per row
    bytes_accessed = (
        xk.size * 2
        + (w1p.size + w2p.size + w3p.size) * 2
        + (b1p.size + b2p.size + b3p.size) * 4
        + B_pad * OUT_PAD * 4
    )

    out = pl.pallas_call(
        mlp_kernel,
        out_shape=jax.ShapeDtypeStruct((B_pad, OUT_PAD), jnp.float32),
        grid=grid,
        in_specs=[
            pl.BlockSpec((TB, D_IN), lambda i: (i, 0)),      # x: tiled over batch
            pl.BlockSpec((D_IN, H1_PAD), lambda i: (0, 0)),  # weights/biases resident
            pl.BlockSpec((1, H1_PAD), lambda i: (0, 0)),
            pl.BlockSpec((H1_PAD, H2), lambda i: (0, 0)),
            pl.BlockSpec((1, H2), lambda i: (0, 0)),
            pl.BlockSpec((H2, OUT_PAD), lambda i: (0, 0)),
            pl.BlockSpec((1, OUT_PAD), lambda i: (0, 0)),
        ],
        out_specs=pl.BlockSpec((TB, OUT_PAD), lambda i: (i, 0)),
        compiler_params=pltpu.CompilerParams(
            dimension_semantics=("parallel",),
        ),
        cost_estimate=pl.CostEstimate(
            flops=flops,
            transcendentals=transcendentals,
            bytes_accessed=bytes_accessed,
        ),
    )(xk, w1p, b1p, w2p, b2p, w3p, b3p)

    return out[:B, :OUT]


def init_params(key):
    """Deterministic init mirroring nn.Linear default (uniform +/- 1/sqrt(fan_in)).
    Weights are stored as [in, out] (transposed vs. PyTorch's [out, in])."""
    dims = [(D_IN, H1), (H1, H2), (H2, OUT)]
    params = []
    for i, (fan_in, fan_out) in enumerate(dims):
        kw, kb = jax.random.split(jax.random.fold_in(key, i))
        bound = 1.0 / jnp.sqrt(jnp.float32(fan_in))
        w = jax.random.uniform(kw, (fan_in, fan_out), jnp.float32, -bound, bound)
        b = jax.random.uniform(kb, (1, fan_out), jnp.float32, -bound, bound)
        params += [w, b]
    return tuple(params)


def reference_forward(x, params):
    """Pure-JAX f32 reference matching the PyTorch module."""
    w1, b1, w2, b2, w3, b3 = params
    x2d = x.reshape(-1, D_IN).astype(jnp.float32)
    h1 = jnp.maximum(x2d @ w1 + b1, 0.0)
    h2 = jnp.maximum(h1 @ w2 + b2, 0.0)
    logits = h2 @ w3 + b3
    return jax.nn.log_softmax(logits, axis=-1)


if __name__ == "__main__":
    key = jax.random.PRNGKey(0)
    params = init_params(key)

    # MNIST-like input, small batch: (B, 1, 28, 28) NCHW, flattened by forward.
    x = jax.random.normal(jax.random.fold_in(key, 123), (2, 1, 28, 28), jnp.float32)

    out = net_forward(x, params)
    out = jax.block_until_ready(out)

    ref = reference_forward(x, params)
    assert out.shape == (2, 10), out.shape
    # bf16 matmul inputs (f32 accumulation) => looser tolerance vs f32 reference.
    assert jnp.allclose(out, ref, atol=5e-2, rtol=5e-2), "mismatch vs JAX reference"
    # Rows of log-probs must normalize: logsumexp == 0.
    assert jnp.allclose(jax.scipy.special.logsumexp(out, axis=-1), 0.0, atol=1e-4)

    print("KERNEL_OK")
</pallas_src>

<mosaic_0001>
module attributes {stable_mosaic.version = 11 : i64} {
  func.func @mlp_kernel(%arg0: i32, %arg1: memref<16x784xbf16, #tpu.memory_space<vmem>>, %arg2: memref<784x512xbf16, #tpu.memory_space<vmem>>, %arg3: memref<1x512xf32, #tpu.memory_space<vmem>>, %arg4: memref<512x256xbf16, #tpu.memory_space<vmem>>, %arg5: memref<1x256xf32, #tpu.memory_space<vmem>>, %arg6: memref<256x128xbf16, #tpu.memory_space<vmem>>, %arg7: memref<1x128xf32, #tpu.memory_space<vmem>>, %arg8: memref<16x128xf32, #tpu.memory_space<vmem>>) attributes {dimension_semantics = [#tpu.dimension_semantics<parallel>], iteration_bounds = array<i64: 1>, scalar_prefetch = 0 : i64, scratch_operands = 0 : i64, tpu.core_type = #tpu.core_type<tc>, window_params = [{transform_indices = @transform_0, window_bounds = array<i64: 16, 784>}, {pipeline_mode = #tpu.pipeline_mode<synchronous>, transform_indices = @transform_1, window_bounds = array<i64: 784, 512>}, {pipeline_mode = #tpu.pipeline_mode<synchronous>, transform_indices = @transform_2, window_bounds = array<i64: 1, 512>}, {pipeline_mode = #tpu.pipeline_mode<synchronous>, transform_indices = @transform_3, window_bounds = array<i64: 512, 256>}, {pipeline_mode = #tpu.pipeline_mode<synchronous>, transform_indices = @transform_4, window_bounds = array<i64: 1, 256>}, {pipeline_mode = #tpu.pipeline_mode<synchronous>, transform_indices = @transform_5, window_bounds = array<i64: 256, 128>}, {pipeline_mode = #tpu.pipeline_mode<synchronous>, transform_indices = @transform_6, window_bounds = array<i64: 1, 128>}, {transform_indices = @transform_7, window_bounds = array<i64: 16, 128>}]} {
    %c0 = arith.constant 0 : index
    %c0_0 = arith.constant 0 : index
    %0 = vector.load %arg1[%c0, %c0_0] : memref<16x784xbf16, #tpu.memory_space<vmem>>, vector<16x784xbf16>
    %c0_1 = arith.constant 0 : index
    %c0_2 = arith.constant 0 : index
    %1 = vector.load %arg2[%c0_1, %c0_2] : memref<784x512xbf16, #tpu.memory_space<vmem>>, vector<784x512xbf16>
    %cst = arith.constant dense<0.000000e+00> : vector<16x512xf32>
    %2 = tpu.matmul %0, %1, %cst {dimension_numbers = #tpu.dot_dimension_numbers<[1], [0], [0], [1], [0, 0, 1, 1], [], []>} : vector<16x784xbf16>, vector<784x512xbf16>, vector<16x512xf32> -> vector<16x512xf32>
    %c0_3 = arith.constant 0 : index
    %c0_4 = arith.constant 0 : index
    %3 = vector.load %arg3[%c0_3, %c0_4] : memref<1x512xf32, #tpu.memory_space<vmem>>, vector<1x512xf32>
    %4 = vector.broadcast %3 : vector<1x512xf32> to vector<16x512xf32>
    %5 = arith.addf %2, %4 : vector<16x512xf32>
    %cst_5 = arith.constant 0.000000e+00 : f32
    %6 = vector.broadcast %cst_5 : f32 to vector<16x512xf32>
    %7 = arith.maximumf %5, %6 : vector<16x512xf32>
    %8 = arith.truncf %7 : vector<16x512xf32> to vector<16x512xbf16>
    %c0_6 = arith.constant 0 : index
    %c0_7 = arith.constant 0 : index
    %9 = vector.load %arg4[%c0_6, %c0_7] : memref<512x256xbf16, #tpu.memory_space<vmem>>, vector<512x256xbf16>
    %cst_8 = arith.constant dense<0.000000e+00> : vector<16x256xf32>
    %10 = tpu.matmul %8, %9, %cst_8 {dimension_numbers = #tpu.dot_dimension_numbers<[1], [0], [0], [1], [0, 0, 1, 1], [], []>} : vector<16x512xbf16>, vector<512x256xbf16>, vector<16x256xf32> -> vector<16x256xf32>
    %c0_9 = arith.constant 0 : index
    %c0_10 = arith.constant 0 : index
    %11 = vector.load %arg5[%c0_9, %c0_10] : memref<1x256xf32, #tpu.memory_space<vmem>>, vector<1x256xf32>
    %12 = vector.broadcast %11 : vector<1x256xf32> to vector<16x256xf32>
    %13 = arith.addf %10, %12 : vector<16x256xf32>
    %cst_11 = arith.constant 0.000000e+00 : f32
    %14 = vector.broadcast %cst_11 : f32 to vector<16x256xf32>
    %15 = arith.maximumf %13, %14 : vector<16x256xf32>
    %16 = arith.truncf %15 : vector<16x256xf32> to vector<16x256xbf16>
    %c0_12 = arith.constant 0 : index
    %c0_13 = arith.constant 0 : index
    %17 = vector.load %arg6[%c0_12, %c0_13] : memref<256x128xbf16, #tpu.memory_space<vmem>>, vector<256x128xbf16>
    %cst_14 = arith.constant dense<0.000000e+00> : vector<16x128xf32>
    %18 = tpu.matmul %16, %17, %cst_14 {dimension_numbers = #tpu.dot_dimension_numbers<[1], [0], [0], [1], [0, 0, 1, 1], [], []>} : vector<16x256xbf16>, vector<256x128xbf16>, vector<16x128xf32> -> vector<16x128xf32>
    %c0_15 = arith.constant 0 : index
    %c0_16 = arith.constant 0 : index
    %19 = vector.load %arg7[%c0_15, %c0_16] : memref<1x128xf32, #tpu.memory_space<vmem>>, vector<1x128xf32>
    %20 = vector.broadcast %19 : vector<1x128xf32> to vector<16x128xf32>
    %21 = arith.addf %18, %20 : vector<16x128xf32>
    %cst_17 = arith.constant dense<0xFF800000> : vector<16xf32>
    %22 = vector.multi_reduction <maximumf>, %21, %cst_17 [1] : vector<16x128xf32> to vector<16xf32>
    %23 = vector.shape_cast %22 : vector<16xf32> to vector<16x1xf32>
    %24 = vector.broadcast %23 : vector<16x1xf32> to vector<16x128xf32>
    %25 = arith.subf %21, %24 : vector<16x128xf32>
    %26 = math.exp %25 : vector<16x128xf32>
    %cst_18 = arith.constant dense<0.000000e+00> : vector<16xf32>
    %27 = vector.multi_reduction <add>, %26, %cst_18 [1] : vector<16x128xf32> to vector<16xf32>
    %28 = vector.shape_cast %27 : vector<16xf32> to vector<16x1xf32>
    %29 = math.log %28 : vector<16x1xf32>
    %30 = vector.broadcast %29 : vector<16x1xf32> to vector<16x128xf32>
    %31 = arith.subf %25, %30 : vector<16x128xf32>
    %c0_19 = arith.constant 0 : index
    %c0_20 = arith.constant 0 : index
    %32 = vector.load %arg8[%c0_19, %c0_20] : memref<16x128xf32, #tpu.memory_space<vmem>>, vector<16x128xf32>
    tpu.vector_store %arg8[%c0_19, %c0_20], %31 {strides = array<i32>} : memref<16x128xf32, #tpu.memory_space<vmem>>, vector<16x128xf32>,
    return
  }
  func.func @transform_0(%arg0: i32) -> (i32, i32) {
    %c0_i32 = arith.constant 0 : i32
    %c0_i32_0 = arith.constant 0 : i32
    return %arg0, %c0_i32 : i32, i32
  }
  func.func @transform_1(%arg0: i32) -> (i32, i32) {
    %c0_i32 = arith.constant 0 : i32
    %c0_i32_0 = arith.constant 0 : i32
    %c0_i32_1 = arith.constant 0 : i32
    return %c0_i32, %c0_i32_0 : i32, i32
  }
  func.func @transform_2(%arg0: i32) -> (i32, i32) {
    %c0_i32 = arith.constant 0 : i32
    %c0_i32_0 = arith.constant 0 : i32
    %c0_i32_1 = arith.constant 0 : i32
    return %c0_i32, %c0_i32_0 : i32, i32
  }
  func.func @transform_3(%arg0: i32) -> (i32, i32) {
    %c0_i32 = arith.constant 0 : i32
    %c0_i32_0 = arith.constant 0 : i32
    %c0_i32_1 = arith.constant 0 : i32
    return %c0_i32, %c0_i32_0 : i32, i32
  }
  func.func @transform_4(%arg0: i32) -> (i32, i32) {
    %c0_i32 = arith.constant 0 : i32
    %c0_i32_0 = arith.constant 0 : i32
    %c0_i32_1 = arith.constant 0 : i32
    return %c0_i32, %c0_i32_0 : i32, i32
  }
  func.func @transform_5(%arg0: i32) -> (i32, i32) {
    %c0_i32 = arith.constant 0 : i32
    %c0_i32_0 = arith.constant 0 : i32
    %c0_i32_1 = arith.constant 0 : i32
    return %c0_i32, %c0_i32_0 : i32, i32
  }
  func.func @transform_6(%arg0: i32) -> (i32, i32) {
    %c0_i32 = arith.constant 0 : i32
    %c0_i32_0 = arith.constant 0 : i32
    %c0_i32_1 = arith.constant 0 : i32
    return %c0_i32, %c0_i32_0 : i32, i32
  }
  func.func @transform_7(%arg0: i32) -> (i32, i32) {
    %c0_i32 = arith.constant 0 : i32
    %c0_i32_0 = arith.constant 0 : i32
    return %arg0, %c0_i32 : i32, i32
  }
}

</mosaic_0001>

<llo_original>
// kernel: tpu_custom_call.1
$region0: #{tpu_custom_call.1}
  #allocation0 [shape = 'u32[]', space=smem, size = 0x4, offset = 0x4, fixed_abs, tag = 'smem constant byte address 0x4 - core index']
  #allocation1 [shape = 'u32[144,128]{1,0:T(1,128)}', space=vmem, size = 0x12000, scoped, tag = 'internal scratch']
  %s0 = inlined_call_operand.hbm [shape: bf16[16,784], index: 0, kind: input, shape index: {}]
  %s1 = inlined_call_operand.hbm [shape: bf16[784,512], index: 1, kind: input, shape index: {}]
  %s2 = inlined_call_operand.vmem [shape: f32[1,512], index: 2, kind: input, shape index: {}]
  %s3 = inlined_call_operand.hbm [shape: bf16[512,256], index: 3, kind: input, shape index: {}]
  %s4 = inlined_call_operand.vmem [shape: f32[1,256], index: 4, kind: input, shape index: {}]
  %s5 = inlined_call_operand.hbm [shape: bf16[256,128], index: 5, kind: input, shape index: {}]
  %s6 = inlined_call_operand.vmem [shape: f32[1,128], index: 6, kind: input, shape index: {}]
  %s7 = inlined_call_operand.hbm [shape: f32[16,128], index: 7, kind: output, shape index: {}]
  %s8 = sld [smem:[#allocation0]]
  $region54: #{tpu_custom_call.1} parent=0
    _
  %s10 = ssub.s32 1, %s8
  %s11 = scalar_select 0, %s10, %s8
  $region1: #{tpu_custom_call.1} parent=0
    #allocation2 [shape = 'u8[28672]{0}', space=vmem, size = 0x7000, scoped, tag = 'input window, operand 0, single buffered']
    #allocation3 [shape = 's32[1]{0}', space=sflag, size = 0x4, scoped, tag = 'scoped memory for tpu_custom_call.1']
    #allocation4 [shape = 's32[1]{0}', space=sflag, size = 0x4, scoped, tag = 'scoped memory for tpu_custom_call.1']
    #allocation5 [shape = 'u8[802816]{0}', space=vmem, size = 0xc4000, scoped, tag = 'input window, operand 1, single buffered']
    #allocation6 [shape = 's32[1]{0}', space=sflag, size = 0x4, scoped, tag = 'scoped memory for tpu_custom_call.1']
    #allocation7 [shape = 'u8[262144]{0}', space=vmem, size = 0x40000, scoped, tag = 'input window, operand 3, single buffered']
    #allocation8 [shape = 'u8[65536]{0}', space=vmem, size = 0x10000, scoped, tag = 'input window, operand 5, single buffered']
    #allocation9 [shape = 's32[1]{0}', space=sflag, size = 0x4, scoped, tag = 'scoped memory for tpu_custom_call.1']
    #allocation10 [shape = 'u8[8192]{0}', space=vmem, size = 0x2000, scoped, tag = 'output window, operand 0, single buffered']
    %12 = vsyncpa [#allocation3], 0
    %13 = vsyncpa [#allocation6], 0
    %14 = vsyncpa [#allocation9], 0
    %15 = vsyncpa [#allocation4], 0
    // Predicated region
    $region2: #{tpu_custom_call.1} parent=1 // pred_check
      _
    $region3: #{tpu_custom_call.1} parent=1 // pred_check_branch
      %17 = sbr.rel (0) target = $region5
    $region4: #{tpu_custom_call.1} parent=1 // pred_region
      %s19 = ssub.s32 896, 896
      %20 = vsyncadd [#allocation3], %s19
      %s21 = sshll.u32 [#allocation2], 4
      %s22 = int_to_ptr.vmem [resolvable:$true] %s21
      %27 = dma.hbm_to_vmem [thread:$0]  %s0, 896, %s22, [#allocation3], 448, 448, 28
    $region5: #{tpu_custom_call.1} parent=1 // pred_fallthru
      _
    // Predicated region
    $region6: #{tpu_custom_call.1} parent=1 // pred_check
      _
    $region7: #{tpu_custom_call.1} parent=1 // pred_check_branch
      %29 = sbr.rel (0) target = $region9
    $region8: #{tpu_custom_call.1} parent=1 // pred_region
      %s31 = ssub.s32 25088, 25088
      %32 = vsyncadd [#allocation6], %s31
      %s33 = sshll.u32 [#allocation5], 4
      %s34 = int_to_ptr.vmem [resolvable:$true] %s33
      %39 = dma.hbm_to_vmem [thread:$0]  %s1, 25088, %s34, [#allocation6], 256, 256, 16
    $region9: #{tpu_custom_call.1} parent=1 // pred_fallthru
      _
    // Predicated region
    $region10: #{tpu_custom_call.1} parent=1 // pred_check
      _
    $region11: #{tpu_custom_call.1} parent=1 // pred_check_branch
      %41 = sbr.rel (0) target = $region13
    $region12: #{tpu_custom_call.1} parent=1 // pred_region
      _
    $region13: #{tpu_custom_call.1} parent=1 // pred_fallthru
      _
    // Predicated region
    $region14: #{tpu_custom_call.1} parent=1 // pred_check
      _
    $region15: #{tpu_custom_call.1} parent=1 // pred_check_branch
      %43 = sbr.rel (0) target = $region17
    $region16: #{tpu_custom_call.1} parent=1 // pred_region
      %s45 = ssub.s32 8192, 8192
      %46 = vsyncadd [#allocation6], %s45
      %s47 = sshll.u32 [#allocation7], 4
      %s48 = int_to_ptr.vmem [resolvable:$true] %s47
      %53 = dma.hbm_to_vmem [thread:$0]  %s3, 8192, %s48, [#allocation6], 128, 128, 8
    $region17: #{tpu_custom_call.1} parent=1 // pred_fallthru
      _
    // Predicated region
    $region18: #{tpu_custom_call.1} parent=1 // pred_check
      _
    $region19: #{tpu_custom_call.1} parent=1 // pred_check_branch
      %55 = sbr.rel (0) target = $region21
    $region20: #{tpu_custom_call.1} parent=1 // pred_region
      _
    $region21: #{tpu_custom_call.1} parent=1 // pred_fallthru
      _
    // Predicated region
    $region22: #{tpu_custom_call.1} parent=1 // pred_check
      _
    $region23: #{tpu_custom_call.1} parent=1 // pred_check_branch
      %57 = sbr.rel (0) target = $region25
    $region24: #{tpu_custom_call.1} parent=1 // pred_region
      %s59 = ssub.s32 2048, 2048
      %60 = vsyncadd [#allocation9], %s59
      %s61 = sshll.u32 [#allocation8], 4
      %s62 = int_to_ptr.vmem [resolvable:$true] %s61
      %67 = dma.hbm_to_vmem [thread:$0]  %s5, 2048, %s62, [#allocation9], 64, 64, 4
    $region25: #{tpu_custom_call.1} parent=1 // pred_fallthru
      _
    // Predicated region
    $region26: #{tpu_custom_call.1} parent=1 // pred_check
      _
    $region27: #{tpu_custom_call.1} parent=1 // pred_check_branch
      %69 = sbr.rel (0) target = $region29
    $region28: #{tpu_custom_call.1} parent=1 // pred_region
      _
    $region29: #{tpu_custom_call.1} parent=1 // pred_fallthru
      _
    // Predicated region
    $region30: #{tpu_custom_call.1} parent=1 // pred_check
      _
    $region31: #{tpu_custom_call.1} parent=1 // pred_check_branch
      %71 = sbr.rel (0) target = $region33
    $region32: #{tpu_custom_call.1} parent=1 // pred_region
      %72 = dma.done [#allocation3], 896
    $region33: #{tpu_custom_call.1} parent=1 // pred_fallthru
      _
    // Predicated region
    $region34: #{tpu_custom_call.1} parent=1 // pred_check
      _
    $region35: #{tpu_custom_call.1} parent=1 // pred_check_branch
      %74 = sbr.rel (0) target = $region37
    $region36: #{tpu_custom_call.1} parent=1 // pred_region
      %75 = dma.done [#allocation6], 25088
    $region37: #{tpu_custom_call.1} parent=1 // pred_fallthru
      _
    // Predicated region
    $region38: #{tpu_custom_call.1} parent=1 // pred_check
      _
    $region39: #{tpu_custom_call.1} parent=1 // pred_check_branch
      %77 = sbr.rel (0) target = $region41
    $region40: #{tpu_custom_call.1} parent=1 // pred_region
      %78 = dma.done [#allocation6], 8192
    $region41: #{tpu_custom_call.1} parent=1 // pred_fallthru
      _
    // Predicated region
    $region42: #{tpu_custom_call.1} parent=1 // pred_check
      _
    $region43: #{tpu_custom_call.1} parent=1 // pred_check_branch
      %80 = sbr.rel (0) target = $region45
    $region44: #{tpu_custom_call.1} parent=1 // pred_region
      %81 = dma.done [#allocation9], 2048
    $region45: #{tpu_custom_call.1} parent=1 // pred_fallthru
      _
    %v83 = vld [vmem:[#allocation2] sm:$0xff]
    %v84 = vld [vmem:[#allocation2 + $0x8] sm:$0xff]
    %v85 = vld [vmem:[#allocation2 + $0x10] sm:$0xff]
    %v86 = vld [vmem:[#allocation2 + $0x18] sm:$0xf]
    %v87 = vld [vmem:[#allocation2 + $0x1c] sm:$0xff]
    %v88 = vld [vmem:[#allocation2 + $0x24] sm:$0xff]
    %v89 = vld [vmem:[#allocation2 + $0x2c] sm:$0xff]
    %v90 = vld [vmem:[#allocation2 + $0x34] sm:$0xf]
    %v91 = vld [vmem:[#allocation5] sm:$0xff]
    %v92 = vld [vmem:[#allocation5 + $0x8] sm:$0xff]
    %v93 = vld [vmem:[#allocation5 + $0x10] sm:$0xff]
    %v94 = vld [vmem:[#allocation5 + $0x18] sm:$0xff]
    %v95 = vld [vmem:[#allocation5 + $0x20] sm:$0xff]
    %v96 = vld [vmem:[#allocation5 + $0x28] sm:$0xff]
    %v97 = vld [vmem:[#allocation5 + $0x30] sm:$0xff]
    %v98 = vld [vmem:[#allocation5 + $0x38] sm:$0xff]
    %v99 = vld [vmem:[#allocation5 + $0x40] sm:$0xff]
    %v100 = vld [vmem:[#allocation5 + $0x48] sm:$0xff]
    %v101 = vld [vmem:[#allocation5 + $0x50] sm:$0xff]
    %v102 = vld [vmem:[#allocation5 + $0x58] sm:$0xff]
    %v103 = vld [vmem:[#allocation5 + $0x60] sm:$0xff]
    %v104 = vld [vmem:[#allocation5 + $0x68] sm:$0xff]
    %v105 = vld [vmem:[#allocation5 + $0x70] sm:$0xff]
    %v106 = vld [vmem:[#allocation5 + $0x78] sm:$0xff]
    %v107 = vld [vmem:[#allocation5 + $0x80] sm:$0xff]
    %v108 = vld [vmem:[#allocation5 + $0x88] sm:$0xff]
    %v109 = vld [vmem:[#allocation5 + $0x90] sm:$0xff]
    %v110 = vld [vmem:[#allocation5 + $0x98] sm:$0xff]
    %v111 = vld [vmem:[#allocation5 + $0xa0] sm:$0xff]
    %v112 = vld [vmem:[#allocation5 + $0xa8] sm:$0xff]
    %v113 = vld [vmem:[#allocation5 + $0xb0] sm:$0xff]
    %v114 = vld [vmem:[#allocation5 + $0xb8] sm:$0xff]
    %v115 = vld [vmem:[#allocation5 + $0xc0] sm:$0xff]
    %v116 = vld [vmem:[#allocation5 + $0xc8] sm:$0xff]
    %v117 = vld [vmem:[#allocation5 + $0xd0] sm:$0xff]
    %v118 = vld [vmem:[#allocation5 + $0xd8] sm:$0xff]
    %v119 = vld [vmem:[#allocation5 + $0xe0] sm:$0xff]
    %v120 = vld [vmem:[#allocation5 + $0xe8] sm:$0xff]
    %v121 = vld [vmem:[#allocation5 + $0xf0] sm:$0xff]
    %v122 = vld [vmem:[#allocation5 + $0xf8] sm:$0xff]
    %v123 = vld [vmem:[#allocation5 + $0x100] sm:$0xff]
    %v124 = vld [vmem:[#allocation5 + $0x108] sm:$0xff]
    %v125 = vld [vmem:[#allocation5 + $0x110] sm:$0xff]
    %v126 = vld [vmem:[#allocation5 + $0x118] sm:$0xff]
    %v127 = vld [vmem:[#allocation5 + $0x120] sm:$0xff]
    %v128 = vld [vmem:[#allocation5 + $0x128] sm:$0xff]
    %v129 = vld [vmem:[#allocation5 + $0x130] sm:$0xff]
    %v130 = vld [vmem:[#allocation5 + $0x138] sm:$0xff]
    %v131 = vld [vmem:[#allocation5 + $0x140] sm:$0xff]
    %v132 = vld [vmem:[#allocation5 + $0x148] sm:$0xff]
    %v133 = vld [vmem:[#allocation5 + $0x150] sm:$0xff]
    %v134 = vld [vmem:[#allocation5 + $0x158] sm:$0xff]
    %v135 = vld [vmem:[#allocation5 + $0x160] sm:$0xff]
    %v136 = vld [vmem:[#allocation5 + $0x168] sm:$0xff]
    %v137 = vld [vmem:[#allocation5 + $0x170] sm:$0xff]
    %v138 = vld [vmem:[#allocation5 + $0x178] sm:$0xff]
    %v139 = vld [vmem:[#allocation5 + $0x180] sm:$0xff]
    %v140 = vld [vmem:[#allocation5 + $0x188] sm:$0xff]
    %v141 = vld [vmem:[#allocation5 + $0x190] sm:$0xff]
    %v142 = vld [vmem:[#allocation5 + $0x198] sm:$0xff]
    %v143 = vld [vmem:[#allocation5 + $0x1a0] sm:$0xff]
    %v144 = vld [vmem:[#allocation5 + $0x1a8] sm:$0xff]
    %v145 = vld [vmem:[#allocation5 + $0x1b0] sm:$0xff]
    %v146 = vld [vmem:[#allocation5 + $0x1b8] sm:$0xff]
    %v147 = vld [vmem:[#allocation5 + $0x1c0] sm:$0xff]
    %v148 = vld [vmem:[#allocation5 + $0x1c8] sm:$0xff]
    %v149 = vld [vmem:[#allocation5 + $0x1d0] sm:$0xff]
    %v150 = vld [vmem:[#allocation5 + $0x1d8] sm:$0xff]
    %v151 = vld [vmem:[#allocation5 + $0x1e0] sm:$0xff]
    %v152 = vld [vmem:[#allocation5 + $0x1e8] sm:$0xff]
    %v153 = vld [vmem:[#allocation5 + $0x1f0] sm:$0xff]
    %v154 = vld [vmem:[#allocation5 + $0x1f8] sm:$0xff]
    %v155 = vld [vmem:[#allocation5 + $0x200] sm:$0xff]
    %v156 = vld [vmem:[#allocation5 + $0x208] sm:$0xff]
    %v157 = vld [vmem:[#allocation5 + $0x210] sm:$0xff]
    %v158 = vld [vmem:[#allocation5 + $0x218] sm:$0xff]
    %v159 = vld [vmem:[#allocation5 + $0x220] sm:$0xff]
    %v160 = vld [vmem:[#allocation5 + $0x228] sm:$0xff]
    %v161 = vld [vmem:[#allocation5 + $0x230] sm:$0xff]
    %v162 = vld [vmem:[#allocation5 + $0x238] sm:$0xff]
    %v163 = vld [vmem:[#allocation5 + $0x240] sm:$0xff]
    %v164 = vld [vmem:[#allocation5 + $0x248] sm:$0xff]
    %v165 = vld [vmem:[#allocation5 + $0x250] sm:$0xff]
    %v166 = vld [vmem:[#allocation5 + $0x258] sm:$0xff]
    %v167 = vld [vmem:[#allocation5 + $0x260] sm:$0xff]
    %v168 = vld [vmem:[#allocation5 + $0x268] sm:$0xff]
    %v169 = vld [vmem:[#allocation5 + $0x270] sm:$0xff]
    %v170 = vld [vmem:[#allocation5 + $0x278] sm:$0xff]
    %v171 = vld [vmem:[#allocation5 + $0x280] sm:$0xff]
    %v172 = vld [vmem:[#allocation5 + $0x288] sm:$0xff]
    %v173 = vld [vmem:[#allocation5 + $0x290] sm:$0xff]
    %v174 = vld [vmem:[#allocation5 + $0x298] sm:$0xff]
    %v175 = vld [vmem:[#allocation5 + $0x2a0] sm:$0xff]
    %v176 = vld [vmem:[#allocation5 + $0x2a8] sm:$0xff]
    %v177 = vld [vmem:[#allocation5 + $0x2b0] sm:$0xff]
    %v178 = vld [vmem:[#allocation5 + $0x2b8] sm:$0xff]
    %v179 = vld [vmem:[#allocation5 + $0x2c0] sm:$0xff]
    %v180 = vld [vmem:[#allocation5 + $0x2c8] sm:$0xff]
    %v181 = vld [vmem:[#allocation5 + $0x2d0] sm:$0xff]
    %v182 = vld [vmem:[#allocation5 + $0x2d8] sm:$0xff]
    %v183 = vld [vmem:[#allocation5 + $0x2e0] sm:$0xff]
    %v184 = vld [vmem:[#allocation5 + $0x2e8] sm:$0xff]
    %v185 = vld [vmem:[#allocation5 + $0x2f0] sm:$0xff]
    %v186 = vld [vmem:[#allocation5 + $0x2f8] sm:$0xff]
    %v187 = vld [vmem:[#allocation5 + $0x300] sm:$0xff]
    %v188 = vld [vmem:[#allocation5 + $0x308] sm:$0xff]
    %v189 = vld [vmem:[#allocation5 + $0x310] sm:$0xff]
    %v190 = vld [vmem:[#allocation5 + $0x318] sm:$0xff]
    %v191 = vld [vmem:[#allocation5 + $0x320] sm:$0xff]
    %v192 = vld [vmem:[#allocation5 + $0x328] sm:$0xff]
    %v193 = vld [vmem:[#allocation5 + $0x330] sm:$0xff]
    %v194 = vld [vmem:[#allocation5 + $0x338] sm:$0xff]
    %v195 = vld [vmem:[#allocation5 + $0x340] sm:$0xff]
    %v196 = vld [vmem:[#allocation5 + $0x348] sm:$0xff]
    %v197 = vld [vmem:[#allocation5 + $0x350] sm:$0xff]
    %v198 = vld [vmem:[#allocation5 + $0x358] sm:$0xff]
    %v199 = vld [vmem:[#allocation5 + $0x360] sm:$0xff]
    %v200 = vld [vmem:[#allocation5 + $0x368] sm:$0xff]
    %v201 = vld [vmem:[#allocation5 + $0x370] sm:$0xff]
    %v202 = vld [vmem:[#allocation5 + $0x378] sm:$0xff]
    %v203 = vld [vmem:[#allocation5 + $0x380] sm:$0xff]
    %v204 = vld [vmem:[#allocation5 + $0x388] sm:$0xff]
    %v205 = vld [vmem:[#allocation5 + $0x390] sm:$0xff]
    %v206 = vld [vmem:[#allocation5 + $0x398] sm:$0xff]
    %v207 = vld [vmem:[#allocation5 + $0x3a0] sm:$0xff]
    %v208 = vld [vmem:[#allocation5 + $0x3a8] sm:$0xff]
    %v209 = vld [vmem:[#allocation5 + $0x3b0] sm:$0xff]
    %v210 = vld [vmem:[#allocation5 + $0x3b8] sm:$0xff]
    %v211 = vld [vmem:[#allocation5 + $0x3c0] sm:$0xff]
    %v212 = vld [vmem:[#allocation5 + $0x3c8] sm:$0xff]
    %v213 = vld [vmem:[#allocation5 + $0x3d0] sm:$0xff]
    %v214 = vld [vmem:[#allocation5 + $0x3d8] sm:$0xff]
    %v215 = vld [vmem:[#allocation5 + $0x3e0] sm:$0xff]
    %v216 = vld [vmem:[#allocation5 + $0x3e8] sm:$0xff]
    %v217 = vld [vmem:[#allocation5 + $0x3f0] sm:$0xff]
    %v218 = vld [vmem:[#allocation5 + $0x3f8] sm:$0xff]
    %v219 = vld [vmem:[#allocation5 + $0x400] sm:$0xff]
    %v220 = vld [vmem:[#allocation5 + $0x408] sm:$0xff]
    %v221 = vld [vmem:[#allocation5 + $0x410] sm:$0xff]
    %v222 = vld [vmem:[#allocation5 + $0x418] sm:$0xff]
    %v223 = vld [vmem:[#allocation5 + $0x420] sm:$0xff]
    %v224 = vld [vmem:[#allocation5 + $0x428] sm:$0xff]
    %v225 = vld [vmem:[#allocation5 + $0x430] sm:$0xff]
    %v226 = vld [vmem:[#allocation5 + $0x438] sm:$0xff]
    %v227 = vld [vmem:[#allocation5 + $0x440] sm:$0xff]
    %v228 = vld [vmem:[#allocation5 + $0x448] sm:$0xff]
    %v229 = vld [vmem:[#allocation5 + $0x450] sm:$0xff]
    %v230 = vld [vmem:[#allocation5 + $0x458] sm:$0xff]
    %v231 = vld [vmem:[#allocation5 + $0x460] sm:$0xff]
    %v232 = vld [vmem:[#allocation5 + $0x468] sm:$0xff]
    %v233 = vld [vmem:[#allocation5 + $0x470] sm:$0xff]
    %v234 = vld [vmem:[#allocation5 + $0x478] sm:$0xff]
    %v235 = vld [vmem:[#allocation5 + $0x480] sm:$0xff]
    %v236 = vld [vmem:[#allocation5 + $0x488] sm:$0xff]
    %v237 = vld [vmem:[#allocation5 + $0x490] sm:$0xff]
    %v238 = vld [vmem:[#allocation5 + $0x498] sm:$0xff]
    %v239 = vld [vmem:[#allocation5 + $0x4a0] sm:$0xff]
    %v240 = vld [vmem:[#allocation5 + $0x4a8] sm:$0xff]
    %v241 = vld [vmem:[#allocation5 + $0x4b0] sm:$0xff]
    %v242 = vld [vmem:[#allocation5 + $0x4b8] sm:$0xff]
    %v243 = vld [vmem:[#allocation5 + $0x4c0] sm:$0xff]
    %v244 = vld [vmem:[#allocation5 + $0x4c8] sm:$0xff]
    %v245 = vld [vmem:[#allocation5 + $0x4d0] sm:$0xff]
    %v246 = vld [vmem:[#allocation5 + $0x4d8] sm:$0xff]
    %v247 = vld [vmem:[#allocation5 + $0x4e0] sm:$0xff]
    %v248 = vld [vmem:[#allocation5 + $0x4e8] sm:$0xff]
    %v249 = vld [vmem:[#allocation5 + $0x4f0] sm:$0xff]
    %v250 = vld [vmem:[#allocation5 + $0x4f8] sm:$0xff]
    %v251 = vld [vmem:[#allocation5 + $0x500] sm:$0xff]
    %v252 = vld [vmem:[#allocation5 + $0x508] sm:$0xff]
    %v253 = vld [vmem:[#allocation5 + $0x510] sm:$0xff]
    %v254 = vld [vmem:[#allocation5 + $0x518] sm:$0xff]
    %v255 = vld [vmem:[#allocation5 + $0x520] sm:$0xff]
    %v256 = vld [vmem:[#allocation5 + $0x528] sm:$0xff]
    %v257 = vld [vmem:[#allocation5 + $0x530] sm:$0xff]
    %v258 = vld [vmem:[#allocation5 + $0x538] sm:$0xff]
    %v259 = vld [vmem:[#allocation5 + $0x540] sm:$0xff]
    %v260 = vld [vmem:[#allocation5 + $0x548] sm:$0xff]
    %v261 = vld [vmem:[#allocation5 + $0x550] sm:$0xff]
    %v262 = vld [vmem:[#allocation5 + $0x558] sm:$0xff]
    %v263 = vld [vmem:[#allocation5 + $0x560] sm:$0xff]
    %v264 = vld [vmem:[#allocation5 + $0x568] sm:$0xff]
    %v265 = vld [vmem:[#allocation5 + $0x570] sm:$0xff]
    %v266 = vld [vmem:[#allocation5 + $0x578] sm:$0xff]
    %v267 = vld [vmem:[#allocation5 + $0x580] sm:$0xff]
    %v268 = vld [vmem:[#allocation5 + $0x588] sm:$0xff]
    %v269 = vld [vmem:[#allocation5 + $0x590] sm:$0xff]
    %v270 = vld [vmem:[#allocation5 + $0x598] sm:$0xff]
    %v271 = vld [vmem:[#allocation5 + $0x5a0] sm:$0xff]
    %v272 = vld [vmem:[#allocation5 + $0x5a8] sm:$0xff]
    %v273 = vld [vmem:[#allocation5 + $0x5b0] sm:$0xff]
    %v274 = vld [vmem:[#allocation5 + $0x5b8] sm:$0xff]
    %v275 = vld [vmem:[#allocation5 + $0x5c0] sm:$0xff]
    %v276 = vld [vmem:[#allocation5 + $0x5c8] sm:$0xff]
    %v277 = vld [vmem:[#allocation5 + $0x5d0] sm:$0xff]
    %v278 = vld [vmem:[#allocation5 + $0x5d8] sm:$0xff]
    %v279 = vld [vmem:[#allocation5 + $0x5e0] sm:$0xff]
    %v280 = vld [vmem:[#allocation5 + $0x5e8] sm:$0xff]
    %v281 = vld [vmem:[#allocation5 + $0x5f0] sm:$0xff]
    %v282 = vld [vmem:[#allocation5 + $0x5f8] sm:$0xff]
    %v283 = vld [vmem:[#allocation5 + $0x600] sm:$0xff]
    %v284 = vld [vmem:[#allocation5 + $0x608] sm:$0xff]
    %v285 = vld [vmem:[#allocation5 + $0x610] sm:$0xff]
    %v286 = vld [vmem:[#allocation5 + $0x618] sm:$0xff]
    %v287 = vld [vmem:[%s2] sm:$0xf]
    %v289 = vlaneseq
    %v290 = vshrl.u32 %v289, 7
    %v291 = vsub.s32 0, %v290
    %v292 = vrot.slane %v287, %v291
    %v293 = vlaneseq
    %v294 = vshrl.u32 %v293, 7
    %v295 = vsub.s32 1, %v294
    %v296 = vrot.slane %v287, %v295
    %v297 = vlaneseq
    %v298 = vshrl.u32 %v297, 7
    %v299 = vsub.s32 2, %v298
    %v300 = vrot.slane %v287, %v299
    %v301 = vlaneseq
    %v302 = vshrl.u32 %v301, 7
    %v303 = vsub.s32 3, %v302
    %v304 = vrot.slane %v287, %v303
    %v317 = vunpack.c.l.b16 %v83
    %v318 = vunpack.c.h.b16 %v83
    %v319 = vunpack.c.l.b16 %v84
    %v320 = vunpack.c.h.b16 %v84
    %v321 = vunpack.c.l.b16 %v85
    %v322 = vunpack.c.h.b16 %v85
    %v323 = vunpack.c.l.b16 %v86
    %v324 = vunpack.c.l.b16 %v87
    %v325 = vunpack.c.h.b16 %v87
    %v326 = vunpack.c.l.b16 %v88
    %v327 = vunpack.c.h.b16 %v88
    %v328 = vunpack.c.l.b16 %v89
    %v329 = vunpack.c.h.b16 %v89
    %v330 = vunpack.c.l.b16 %v90
    %v331 = vpack.c.b16 %v324, %v317
    %v332 = vpack.c.b16 %v325, %v318
    %v333 = vpack.c.b16 %v326, %v319
    %v334 = vpack.c.b16 %v327, %v320
    %v335 = vpack.c.b16 %v328, %v321
    %v336 = vpack.c.b16 %v329, %v322
    %v337 = vpack.c.b16 %v330, %v323
    %v540 = vunpack.c.l.b16 %v91
    %v541 = vunpack.c.h.b16 %v91
    %v542 = vunpack.c.l.b16 %v92
    %v543 = vunpack.c.h.b16 %v92
    %v544 = vunpack.c.l.b16 %v93
    %v545 = vunpack.c.h.b16 %v93
    %v546 = vunpack.c.l.b16 %v94
    %v547 = vunpack.c.h.b16 %v94
    %v548 = vunpack.c.l.b16 %v95
    %v549 = vunpack.c.h.b16 %v95
    %v550 = vunpack.c.l.b16 %v96
    %v551 = vunpack.c.h.b16 %v96
    %v552 = vunpack.c.l.b16 %v97
    %v553 = vunpack.c.h.b16 %v97
    %v554 = vunpack.c.l.b16 %v98
    %v555 = vunpack.c.h.b16 %v98
    %v556 = vunpack.c.l.b16 %v99
    %v557 = vunpack.c.h.b16 %v99
    %v558 = vunpack.c.l.b16 %v100
    %v559 = vunpack.c.h.b16 %v100
    %v560 = vunpack.c.l.b16 %v101
    %v561 = vunpack.c.h.b16 %v101
    %v562 = vunpack.c.l.b16 %v102
    %v563 = vunpack.c.h.b16 %v102
    %v564 = vunpack.c.l.b16 %v103
    %v565 = vunpack.c.h.b16 %v103
    %v566 = vunpack.c.l.b16 %v104
    %v567 = vunpack.c.h.b16 %v104
    %v568 = vunpack.c.l.b16 %v105
    %v569 = vunpack.c.h.b16 %v105
    %v570 = vunpack.c.l.b16 %v106
    %v571 = vunpack.c.h.b16 %v106
    %v572 = vunpack.c.l.b16 %v107
    %v573 = vunpack.c.h.b16 %v107
    %v574 = vunpack.c.l.b16 %v108
    %v575 = vunpack.c.h.b16 %v108
    %v576 = vunpack.c.l.b16 %v109
    %v577 = vunpack.c.h.b16 %v109
    %v578 = vunpack.c.l.b16 %v110
    %v579 = vunpack.c.h.b16 %v110
    %v580 = vunpack.c.l.b16 %v111
    %v581 = vunpack.c.h.b16 %v111
    %v582 = vunpack.c.l.b16 %v112
    %v583 = vunpack.c.h.b16 %v112
    %v584 = vunpack.c.l.b16 %v113
    %v585 = vunpack.c.h.b16 %v113
    %v586 = vunpack.c.l.b16 %v114
    %v587 = vunpack.c.h.b16 %v114
    %v588 = vunpack.c.l.b16 %v115
    %v589 = vunpack.c.h.b16 %v115
    %v590 = vunpack.c.l.b16 %v116
    %v591 = vunpack.c.h.b16 %v116
    %v592 = vunpack.c.l.b16 %v117
    %v593 = vunpack.c.h.b16 %v117
    %v594 = vunpack.c.l.b16 %v118
    %v595 = vunpack.c.h.b16 %v118
    %v596 = vunpack.c.l.b16 %v119
    %v597 = vunpack.c.h.b16 %v119
    %v598 = vunpack.c.l.b16 %v120
    %v599 = vunpack.c.h.b16 %v120
    %v600 = vunpack.c.l.b16 %v121
    %v601 = vunpack.c.h.b16 %v121
    %v602 = vunpack.c.l.b16 %v122
    %v603 = vunpack.c.h.b16 %v122
    %v604 = vunpack.c.l.b16 %v123
    %v605 = vunpack.c.h.b16 %v123
    %v606 = vunpack.c.l.b16 %v124
    %v607 = vunpack.c.h.b16 %v124
    %v608 = vunpack.c.l.b16 %v125
    %v609 = vunpack.c.h.b16 %v125
    %v610 = vunpack.c.l.b16 %v126
    %v611 = vunpack.c.h.b16 %v126
    %v612 = vunpack.c.l.b16 %v127
    %v613 = vunpack.c.h.b16 %v127
    %v614 = vunpack.c.l.b16 %v128
    %v615 = vunpack.c.h.b16 %v128
    %v616 = vunpack.c.l.b16 %v129
    %v617 = vunpack.c.h.b16 %v129
    %v618 = vunpack.c.l.b16 %v130
    %v619 = vunpack.c.h.b16 %v130
    %v620 = vunpack.c.l.b16 %v131
    %v621 = vunpack.c.h.b16 %v131
    %v622 = vunpack.c.l.b16 %v132
    %v623 = vunpack.c.h.b16 %v132
    %v624 = vunpack.c.l.b16 %v133
    %v625 = vunpack.c.h.b16 %v133
    %v626 = vunpack.c.l.b16 %v134
    %v627 = vunpack.c.h.b16 %v134
    %v628 = vunpack.c.l.b16 %v135
    %v629 = vunpack.c.h.b16 %v135
    %v630 = vunpack.c.l.b16 %v136
    %v631 = vunpack.c.h.b16 %v136
    %v632 = vunpack.c.l.b16 %v137
    %v633 = vunpack.c.h.b16 %v137
    %v634 = vunpack.c.l.b16 %v138
    %v635 = vunpack.c.h.b16 %v138
    %v636 = vunpack.c.l.b16 %v139
    %v637 = vunpack.c.h.b16 %v139
    %v638 = vunpack.c.l.b16 %v140
    %v639 = vunpack.c.h.b16 %v140
    %v640 = vunpack.c.l.b16 %v141
    %v641 = vunpack.c.h.b16 %v141
    %v642 = vunpack.c.l.b16 %v142
    %v643 = vunpack.c.h.b16 %v142
    %v644 = vunpack.c.l.b16 %v143
    %v645 = vunpack.c.h.b16 %v143
    %v646 = vunpack.c.l.b16 %v144
    %v647 = vunpack.c.h.b16 %v144
    %v648 = vunpack.c.l.b16 %v145
    %v649 = vunpack.c.h.b16 %v145
    %v650 = vunpack.c.l.b16 %v146
    %v651 = vunpack.c.h.b16 %v146
    %v652 = vunpack.c.l.b16 %v147
    %v653 = vunpack.c.h.b16 %v147
    %v654 = vunpack.c.l.b16 %v148
    %v655 = vunpack.c.h.b16 %v148
    %v656 = vunpack.c.l.b16 %v149
    %v657 = vunpack.c.h.b16 %v149
    %v658 = vunpack.c.l.b16 %v150
    %v659 = vunpack.c.h.b16 %v150
    %v660 = vunpack.c.l.b16 %v151
    %v661 = vunpack.c.h.b16 %v151
    %v662 = vunpack.c.l.b16 %v152
    %v663 = vunpack.c.h.b16 %v152
    %v664 = vunpack.c.l.b16 %v153
    %v665 = vunpack.c.h.b16 %v153
    %v666 = vunpack.c.l.b16 %v154
    %v667 = vunpack.c.h.b16 %v154
    %v668 = vunpack.c.l.b16 %v155
    %v669 = vunpack.c.h.b16 %v155
    %v670 = vunpack.c.l.b16 %v156
    %v671 = vunpack.c.h.b16 %v156
    %v672 = vunpack.c.l.b16 %v157
    %v673 = vunpack.c.h.b16 %v157
    %v674 = vunpack.c.l.b16 %v158
    %v675 = vunpack.c.h.b16 %v158
    %v676 = vunpack.c.l.b16 %v159
    %v677 = vunpack.c.h.b16 %v159
    %v678 = vunpack.c.l.b16 %v160
    %v679 = vunpack.c.h.b16 %v160
    %v680 = vunpack.c.l.b16 %v161
    %v681 = vunpack.c.h.b16 %v161
    %v682 = vunpack.c.l.b16 %v162
    %v683 = vunpack.c.h.b16 %v162
    %v684 = vunpack.c.l.b16 %v163
    %v685 = vunpack.c.h.b16 %v163
    %v686 = vunpack.c.l.b16 %v164
    %v687 = vunpack.c.h.b16 %v164
    %v688 = vunpack.c.l.b16 %v165
    %v689 = vunpack.c.h.b16 %v165
    %v690 = vunpack.c.l.b16 %v166
    %v691 = vunpack.c.h.b16 %v166
    %v692 = vunpack.c.l.b16 %v167
    %v693 = vunpack.c.h.b16 %v167
    %v694 = vunpack.c.l.b16 %v168
    %v695 = vunpack.c.h.b16 %v168
    %v696 = vunpack.c.l.b16 %v169
    %v697 = vunpack.c.h.b16 %v169
    %v698 = vunpack.c.l.b16 %v170
    %v699 = vunpack.c.h.b16 %v170
    %v700 = vunpack.c.l.b16 %v171
    %v701 = vunpack.c.h.b16 %v171
    %v702 = vunpack.c.l.b16 %v172
    %v703 = vunpack.c.h.b16 %v172
    %v704 = vunpack.c.l.b16 %v173
    %v705 = vunpack.c.h.b16 %v173
    %v706 = vunpack.c.l.b16 %v174
    %v707 = vunpack.c.h.b16 %v174
    %v708 = vunpack.c.l.b16 %v175
    %v709 = vunpack.c.h.b16 %v175
    %v710 = vunpack.c.l.b16 %v176
    %v711 = vunpack.c.h.b16 %v176
    %v712 = vunpack.c.l.b16 %v177
    %v713 = vunpack.c.h.b16 %v177
    %v714 = vunpack.c.l.b16 %v178
    %v715 = vunpack.c.h.b16 %v178
    %v716 = vunpack.c.l.b16 %v179
    %v717 = vunpack.c.h.b16 %v179
    %v718 = vunpack.c.l.b16 %v180
    %v719 = vunpack.c.h.b16 %v180
    %v720 = vunpack.c.l.b16 %v181
    %v721 = vunpack.c.h.b16 %v181
    %v722 = vunpack.c.l.b16 %v182
    %v723 = vunpack.c.h.b16 %v182
    %v724 = vunpack.c.l.b16 %v183
    %v725 = vunpack.c.h.b16 %v183
    %v726 = vunpack.c.l.b16 %v184
    %v727 = vunpack.c.h.b16 %v184
    %v728 = vunpack.c.l.b16 %v185
    %v729 = vunpack.c.h.b16 %v185
    %v730 = vunpack.c.l.b16 %v186
    %v731 = vunpack.c.h.b16 %v186
    %v732 = vunpack.c.l.b16 %v187
    %v733 = vunpack.c.h.b16 %v187
    %v734 = vunpack.c.l.b16 %v188
    %v735 = vunpack.c.h.b16 %v188
    %v736 = vunpack.c.l.b16 %v189
    %v737 = vunpack.c.h.b16 %v189
    %v738 = vunpack.c.l.b16 %v190
    %v739 = vunpack.c.h.b16 %v190
    %v740 = vunpack.c.l.b16 %v191
    %v741 = vunpack.c.h.b16 %v191
    %v742 = vunpack.c.l.b16 %v192
    %v743 = vunpack.c.h.b16 %v192
    %v744 = vunpack.c.l.b16 %v193
    %v745 = vunpack.c.h.b16 %v193
    %v746 = vunpack.c.l.b16 %v194
    %v747 = vunpack.c.h.b16 %v194
    %v748 = vunpack.c.l.b16 %v195
    %v749 = vunpack.c.h.b16 %v195
    %v750 = vunpack.c.l.b16 %v196
    %v751 = vunpack.c.h.b16 %v196
    %v752 = vunpack.c.l.b16 %v197
    %v753 = vunpack.c.h.b16 %v197
    %v754 = vunpack.c.l.b16 %v198
    %v755 = vunpack.c.h.b16 %v198
    %v756 = vunpack.c.l.b16 %v199
    %v757 = vunpack.c.h.b16 %v199
    %v758 = vunpack.c.l.b16 %v200
    %v759 = vunpack.c.h.b16 %v200
    %v760 = vunpack.c.l.b16 %v201
    %v761 = vunpack.c.h.b16 %v201
    %v762 = vunpack.c.l.b16 %v202
    %v763 = vunpack.c.h.b16 %v202
    %v764 = vunpack.c.l.b16 %v203
    %v765 = vunpack.c.h.b16 %v203
    %v766 = vunpack.c.l.b16 %v204
    %v767 = vunpack.c.h.b16 %v204
    %v768 = vunpack.c.l.b16 %v205
    %v769 = vunpack.c.h.b16 %v205
    %v770 = vunpack.c.l.b16 %v206
    %v771 = vunpack.c.h.b16 %v206
    %v772 = vunpack.c.l.b16 %v207
    %v773 = vunpack.c.h.b16 %v207
    %v774 = vunpack.c.l.b16 %v208
    %v775 = vunpack.c.h.b16 %v208
    %v776 = vunpack.c.l.b16 %v209
    %v777 = vunpack.c.h.b16 %v209
    %v778 = vunpack.c.l.b16 %v210
    %v779 = vunpack.c.h.b16 %v210
    %v780 = vunpack.c.l.b16 %v211
    %v781 = vunpack.c.h.b16 %v211
    %v782 = vunpack.c.l.b16 %v212
    %v783 = vunpack.c.h.b16 %v212
    %v784 = vunpack.c.l.b16 %v213
    %v785 = vunpack.c.h.b16 %v213
    %v786 = vunpack.c.l.b16 %v214
    %v787 = vunpack.c.h.b16 %v214
    %v788 = vunpack.c.l.b16 %v215
    %v789 = vunpack.c.h.b16 %v215
    %v790 = vunpack.c.l.b16 %v216
    %v791 = vunpack.c.h.b16 %v216
    %v792 = vunpack.c.l.b16 %v217
    %v793 = vunpack.c.h.b16 %v217
    %v794 = vunpack.c.l.b16 %v218
    %v795 = vunpack.c.h.b16 %v218
    %v796 = vunpack.c.l.b16 %v219
    %v797 = vunpack.c.h.b16 %v219
    %v798 = vunpack.c.l.b16 %v220
    %v799 = vunpack.c.h.b16 %v220
    %v800 = vunpack.c.l.b16 %v221
    %v801 = vunpack.c.h.b16 %v221
    %v802 = vunpack.c.l.b16 %v222
    %v803 = vunpack.c.h.b16 %v222
    %v804 = vunpack.c.l.b16 %v223
    %v805 = vunpack.c.h.b16 %v223
    %v806 = vunpack.c.l.b16 %v224
    %v807 = vunpack.c.h.b16 %v224
    %v808 = vunpack.c.l.b16 %v225
    %v809 = vunpack.c.h.b16 %v225
    %v810 = vunpack.c.l.b16 %v226
    %v811 = vunpack.c.h.b16 %v226
    %v812 = vunpack.c.l.b16 %v227
    %v813 = vunpack.c.h.b16 %v227
    %v814 = vunpack.c.l.b16 %v228
    %v815 = vunpack.c.h.b16 %v228
    %v816 = vunpack.c.l.b16 %v229
    %v817 = vunpack.c.h.b16 %v229
    %v818 = vunpack.c.l.b16 %v230
    %v819 = vunpack.c.h.b16 %v230
    %v820 = vunpack.c.l.b16 %v231
    %v821 = vunpack.c.h.b16 %v231
    %v822 = vunpack.c.l.b16 %v232
    %v823 = vunpack.c.h.b16 %v232
    %v824 = vunpack.c.l.b16 %v233
    %v825 = vunpack.c.h.b16 %v233
    %v826 = vunpack.c.l.b16 %v234
    %v827 = vunpack.c.h.b16 %v234
    %v828 = vunpack.c.l.b16 %v235
    %v829 = vunpack.c.h.b16 %v235
    %v830 = vunpack.c.l.b16 %v236
    %v831 = vunpack.c.h.b16 %v236
    %v832 = vunpack.c.l.b16 %v237
    %v833 = vunpack.c.h.b16 %v237
    %v834 = vunpack.c.l.b16 %v238
    %v835 = vunpack.c.h.b16 %v238
    %v836 = vunpack.c.l.b16 %v239
    %v837 = vunpack.c.h.b16 %v239
    %v838 = vunpack.c.l.b16 %v240
    %v839 = vunpack.c.h.b16 %v240
    %v840 = vunpack.c.l.b16 %v241
    %v841 = vunpack.c.h.b16 %v241
    %v842 = vunpack.c.l.b16 %v242
    %v843 = vunpack.c.h.b16 %v242
    %v844 = vunpack.c.l.b16 %v243
    %v845 = vunpack.c.h.b16 %v243
    %v846 = vunpack.c.l.b16 %v244
    %v847 = vunpack.c.h.b16 %v244
    %v848 = vunpack.c.l.b16 %v245
    %v849 = vunpack.c.h.b16 %v245
    %v850 = vunpack.c.l.b16 %v246
    %v851 = vunpack.c.h.b16 %v246
    %v852 = vunpack.c.l.b16 %v247
    %v853 = vunpack.c.h.b16 %v247
    %v854 = vunpack.c.l.b16 %v248
    %v855 = vunpack.c.h.b16 %v248
    %v856 = vunpack.c.l.b16 %v249
    %v857 = vunpack.c.h.b16 %v249
    %v858 = vunpack.c.l.b16 %v250
    %v859 = vunpack.c.h.b16 %v250
    %v860 = vunpack.c.l.b16 %v251
    %v861 = vunpack.c.h.b16 %v251
    %v862 = vunpack.c.l.b16 %v252
    %v863 = vunpack.c.h.b16 %v252
    %v864 = vunpack.c.l.b16 %v253
    %v865 = vunpack.c.h.b16 %v253
    %v866 = vunpack.c.l.b16 %v254
    %v867 = vunpack.c.h.b16 %v254
    %v868 = vunpack.c.l.b16 %v255
    %v869 = vunpack.c.h.b16 %v255
    %v870 = vunpack.c.l.b16 %v256
    %v871 = vunpack.c.h.b16 %v256
    %v872 = vunpack.c.l.b16 %v257
    %v873 = vunpack.c.h.b16 %v257
    %v874 = vunpack.c.l.b16 %v258
    %v875 = vunpack.c.h.b16 %v258
    %v876 = vunpack.c.l.b16 %v259
    %v877 = vunpack.c.h.b16 %v259
    %v878 = vunpack.c.l.b16 %v260
    %v879 = vunpack.c.h.b16 %v260
    %v880 = vunpack.c.l.b16 %v261
    %v881 = vunpack.c.h.b16 %v261
    %v882 = vunpack.c.l.b16 %v262
    %v883 = vunpack.c.h.b16 %v262
    %v884 = vunpack.c.l.b16 %v263
    %v885 = vunpack.c.h.b16 %v263
    %v886 = vunpack.c.l.b16 %v264
    %v887 = vunpack.c.h.b16 %v264
    %v888 = vunpack.c.l.b16 %v265
    %v889 = vunpack.c.h.b16 %v265
    %v890 = vunpack.c.l.b16 %v266
    %v891 = vunpack.c.h.b16 %v266
    %v892 = vunpack.c.l.b16 %v267
    %v893 = vunpack.c.h.b16 %v267
    %v894 = vunpack.c.l.b16 %v268
    %v895 = vunpack.c.h.b16 %v268
    %v896 = vunpack.c.l.b16 %v269
    %v897 = vunpack.c.h.b16 %v269
    %v898 = vunpack.c.l.b16 %v270
    %v899 = vunpack.c.h.b16 %v270
    %v900 = vunpack.c.l.b16 %v271
    %v901 = vunpack.c.h.b16 %v271
    %v902 = vunpack.c.l.b16 %v272
    %v903 = vunpack.c.h.b16 %v272
    %v904 = vunpack.c.l.b16 %v273
    %v905 = vunpack.c.h.b16 %v273
    %v906 = vunpack.c.l.b16 %v274
    %v907 = vunpack.c.h.b16 %v274
    %v908 = vunpack.c.l.b16 %v275
    %v909 = vunpack.c.h.b16 %v275
    %v910 = vunpack.c.l.b16 %v276
    %v911 = vunpack.c.h.b16 %v276
    %v912 = vunpack.c.l.b16 %v277
    %v913 = vunpack.c.h.b16 %v277
    %v914 = vunpack.c.l.b16 %v278
    %v915 = vunpack.c.h.b16 %v278
    %v916 = vunpack.c.l.b16 %v279
    %v917 = vunpack.c.h.b16 %v279
    %v918 = vunpack.c.l.b16 %v280
    %v919 = vunpack.c.h.b16 %v280
    %v920 = vunpack.c.l.b16 %v281
    %v921 = vunpack.c.h.b16 %v281
    %v922 = vunpack.c.l.b16 %v282
    %v923 = vunpack.c.h.b16 %v282
    %v924 = vunpack.c.l.b16 %v283
    %v925 = vunpack.c.h.b16 %v283
    %v926 = vunpack.c.l.b16 %v284
    %v927 = vunpack.c.h.b16 %v284
    %v928 = vunpack.c.l.b16 %v285
    %v929 = vunpack.c.h.b16 %v285
    %v930 = vunpack.c.l.b16 %v286
    %v931 = vunpack.c.h.b16 %v286
    %v932 = vpack.c.b16 %v544, %v540
    %v933 = vpack.c.b16 %v545, %v541
    %v934 = vpack.c.b16 %v546, %v542
    %v935 = vpack.c.b16 %v547, %v543
    %v936 = vpack.c.b16 %v552, %v548
    %v937 = vpack.c.b16 %v553, %v549
    %v938 = vpack.c.b16 %v554, %v550
    %v939 = vpack.c.b16 %v555, %v551
    %v940 = vpack.c.b16 %v560, %v556
    %v941 = vpack.c.b16 %v561, %v557
    %v942 = vpack.c.b16 %v562, %v558
    %v943 = vpack.c.b16 %v563, %v559
    %v944 = vpack.c.b16 %v568, %v564
    %v945 = vpack.c.b16 %v569, %v565
    %v946 = vpack.c.b16 %v570, %v566
    %v947 = vpack.c.b16 %v571, %v567
    %v948 = vpack.c.b16 %v576, %v572
    %v949 = vpack.c.b16 %v577, %v573
    %v950 = vpack.c.b16 %v578, %v574
    %v951 = vpack.c.b16 %v579, %v575
    %v952 = vpack.c.b16 %v584, %v580
    %v953 = vpack.c.b16 %v585, %v581
    %v954 = vpack.c.b16 %v586, %v582
    %v955 = vpack.c.b16 %v587, %v583
    %v956 = vpack.c.b16 %v592, %v588
    %v957 = vpack.c.b16 %v593, %v589
    %v958 = vpack.c.b16 %v594, %v590
    %v959 = vpack.c.b16 %v595, %v591
    %v960 = vpack.c.b16 %v600, %v596
    %v961 = vpack.c.b16 %v601, %v597
    %v962 = vpack.c.b16 %v602, %v598
    %v963 = vpack.c.b16 %v603, %v599
    %v964 = vpack.c.b16 %v608, %v604
    %v965 = vpack.c.b16 %v609, %v605
    %v966 = vpack.c.b16 %v610, %v606
    %v967 = vpack.c.b16 %v611, %v607
    %v968 = vpack.c.b16 %v616, %v612
    %v969 = vpack.c.b16 %v617, %v613
    %v970 = vpack.c.b16 %v618, %v614
    %v971 = vpack.c.b16 %v619, %v615
    %v972 = vpack.c.b16 %v624, %v620
    %v973 = vpack.c.b16 %v625, %v621
    %v974 = vpack.c.b16 %v626, %v622
    %v975 = vpack.c.b16 %v627, %v623
    %v976 = vpack.c.b16 %v632, %v628
    %v977 = vpack.c.b16 %v633, %v629
    %v978 = vpack.c.b16 %v634, %v630
    %v979 = vpack.c.b16 %v635, %v631
    %v980 = vpack.c.b16 %v640, %v636
    %v981 = vpack.c.b16 %v641, %v637
    %v982 = vpack.c.b16 %v642, %v638
    %v983 = vpack.c.b16 %v643, %v639
    %v984 = vpack.c.b16 %v648, %v644
    %v985 = vpack.c.b16 %v649, %v645
    %v986 = vpack.c.b16 %v650, %v646
    %v987 = vpack.c.b16 %v651, %v647
    %v988 = vpack.c.b16 %v656, %v652
    %v989 = vpack.c.b16 %v657, %v653
    %v990 = vpack.c.b16 %v658, %v654
    %v991 = vpack.c.b16 %v659, %v655
    %v992 = vpack.c.b16 %v664, %v660
    %v993 = vpack.c.b16 %v665, %v661
    %v994 = vpack.c.b16 %v666, %v662
    %v995 = vpack.c.b16 %v667, %v663
    %v996 = vpack.c.b16 %v672, %v668
    %v997 = vpack.c.b16 %v673, %v669
    %v998 = vpack.c.b16 %v674, %v670
    %v999 = vpack.c.b16 %v675, %v671
    %v1000 = vpack.c.b16 %v680, %v676
    %v1001 = vpack.c.b16 %v681, %v677
    %v1002 = vpack.c.b16 %v682, %v678
    %v1003 = vpack.c.b16 %v683, %v679
    %v1004 = vpack.c.b16 %v688, %v684
    %v1005 = vpack.c.b16 %v689, %v685
    %v1006 = vpack.c.b16 %v690, %v686
    %v1007 = vpack.c.b16 %v691, %v687
    %v1008 = vpack.c.b16 %v696, %v692
    %v1009 = vpack.c.b16 %v697, %v693
    %v1010 = vpack.c.b16 %v698, %v694
    %v1011 = vpack.c.b16 %v699, %v695
    %v1012 = vpack.c.b16 %v704, %v700
    %v1013 = vpack.c.b16 %v705, %v701
    %v1014 = vpack.c.b16 %v706, %v702
    %v1015 = vpack.c.b16 %v707, %v703
    %v1016 = vpack.c.b16 %v712, %v708
    %v1017 = vpack.c.b16 %v713, %v709
    %v1018 = vpack.c.b16 %v714, %v710
    %v1019 = vpack.c.b16 %v715, %v711
    %v1020 = vpack.c.b16 %v720, %v716
    %v1021 = vpack.c.b16 %v721, %v717
    %v1022 = vpack.c.b16 %v722, %v718
    %v1023 = vpack.c.b16 %v723, %v719
    %v1024 = vpack.c.b16 %v728, %v724
    %v1025 = vpack.c.b16 %v729, %v725
    %v1026 = vpack.c.b16 %v730, %v726
    %v1027 = vpack.c.b16 %v731, %v727
    %v1028 = vpack.c.b16 %v736, %v732
    %v1029 = vpack.c.b16 %v737, %v733
    %v1030 = vpack.c.b16 %v738, %v734
    %v1031 = vpack.c.b16 %v739, %v735
    %v1032 = vpack.c.b16 %v744, %v740
    %v1033 = vpack.c.b16 %v745, %v741
    %v1034 = vpack.c.b16 %v746, %v742
    %v1035 = vpack.c.b16 %v747, %v743
    %v1036 = vpack.c.b16 %v752, %v748
    %v1037 = vpack.c.b16 %v753, %v749
    %v1038 = vpack.c.b16 %v754, %v750
    %v1039 = vpack.c.b16 %v755, %v751
    %v1040 = vpack.c.b16 %v760, %v756
    %v1041 = vpack.c.b16 %v761, %v757
    %v1042 = vpack.c.b16 %v762, %v758
    %v1043 = vpack.c.b16 %v763, %v759
    %v1044 = vpack.c.b16 %v768, %v764
    %v1045 = vpack.c.b16 %v769, %v765
    %v1046 = vpack.c.b16 %v770, %v766
    %v1047 = vpack.c.b16 %v771, %v767
    %v1048 = vpack.c.b16 %v776, %v772
    %v1049 = vpack.c.b16 %v777, %v773
    %v1050 = vpack.c.b16 %v778, %v774
    %v1051 = vpack.c.b16 %v779, %v775
    %v1052 = vpack.c.b16 %v784, %v780
    %v1053 = vpack.c.b16 %v785, %v781
    %v1054 = vpack.c.b16 %v786, %v782
    %v1055 = vpack.c.b16 %v787, %v783
    %v1056 = vpack.c.b16 %v792, %v788
    %v1057 = vpack.c.b16 %v793, %v789
    %v1058 = vpack.c.b16 %v794, %v790
    %v1059 = vpack.c.b16 %v795, %v791
    %v1060 = vpack.c.b16 %v800, %v796
    %v1061 = vpack.c.b16 %v801, %v797
    %v1062 = vpack.c.b16 %v802, %v798
    %v1063 = vpack.c.b16 %v803, %v799
    %v1064 = vpack.c.b16 %v808, %v804
    %v1065 = vpack.c.b16 %v809, %v805
    %v1066 = vpack.c.b16 %v810, %v806
    %v1067 = vpack.c.b16 %v811, %v807
    %v1068 = vpack.c.b16 %v816, %v812
    %v1069 = vpack.c.b16 %v817, %v813
    %v1070 = vpack.c.b16 %v818, %v814
    %v1071 = vpack.c.b16 %v819, %v815
    %v1072 = vpack.c.b16 %v824, %v820
    %v1073 = vpack.c.b16 %v825, %v821
    %v1074 = vpack.c.b16 %v826, %v822
    %v1075 = vpack.c.b16 %v827, %v823
    %v1076 = vpack.c.b16 %v832, %v828
    %v1077 = vpack.c.b16 %v833, %v829
    %v1078 = vpack.c.b16 %v834, %v830
    %v1079 = vpack.c.b16 %v835, %v831
    %v1080 = vpack.c.b16 %v840, %v836
    %v1081 = vpack.c.b16 %v841, %v837
    %v1082 = vpack.c.b16 %v842, %v838
    %v1083 = vpack.c.b16 %v843, %v839
    %v1084 = vpack.c.b16 %v848, %v844
    %v1085 = vpack.c.b16 %v849, %v845
    %v1086 = vpack.c.b16 %v850, %v846
    %v1087 = vpack.c.b16 %v851, %v847
    %v1088 = vpack.c.b16 %v856, %v852
    %v1089 = vpack.c.b16 %v857, %v853
    %v1090 = vpack.c.b16 %v858, %v854
    %v1091 = vpack.c.b16 %v859, %v855
    %v1092 = vpack.c.b16 %v864, %v860
    %v1093 = vpack.c.b16 %v865, %v861
    %v1094 = vpack.c.b16 %v866, %v862
    %v1095 = vpack.c.b16 %v867, %v863
    %v1096 = vpack.c.b16 %v872, %v868
    %v1097 = vpack.c.b16 %v873, %v869
    %v1098 = vpack.c.b16 %v874, %v870
    %v1099 = vpack.c.b16 %v875, %v871
    %v1100 = vpack.c.b16 %v880, %v876
    %v1101 = vpack.c.b16 %v881, %v877
    %v1102 = vpack.c.b16 %v882, %v878
    %v1103 = vpack.c.b16 %v883, %v879
    %v1104 = vpack.c.b16 %v888, %v884
    %v1105 = vpack.c.b16 %v889, %v885
    %v1106 = vpack.c.b16 %v890, %v886
    %v1107 = vpack.c.b16 %v891, %v887
    %v1108 = vpack.c.b16 %v896, %v892
    %v1109 = vpack.c.b16 %v897, %v893
    %v1110 = vpack.c.b16 %v898, %v894
    %v1111 = vpack.c.b16 %v899, %v895
    %v1112 = vpack.c.b16 %v904, %v900
    %v1113 = vpack.c.b16 %v905, %v901
    %v1114 = vpack.c.b16 %v906, %v902
    %v1115 = vpack.c.b16 %v907, %v903
    %v1116 = vpack.c.b16 %v912, %v908
    %v1117 = vpack.c.b16 %v913, %v909
    %v1118 = vpack.c.b16 %v914, %v910
    %v1119 = vpack.c.b16 %v915, %v911
    %v1120 = vpack.c.b16 %v920, %v916
    %v1121 = vpack.c.b16 %v921, %v917
    %v1122 = vpack.c.b16 %v922, %v918
    %v1123 = vpack.c.b16 %v923, %v919
    %v1124 = vpack.c.b16 %v928, %v924
    %v1125 = vpack.c.b16 %v929, %v925
    %v1126 = vpack.c.b16 %v930, %v926
    %v1127 = vpack.c.b16 %v931, %v927
    %vm1324 = vcmask 130048
    %v1326 = vsel %vm1324, %v337, 0
    %1328 = vmatprep.subr.bf16.mxu0 %v933
    %1329 = vmatpush1.bf16.msra.mxu0 %v932
    %1330 = vmatprep.subr.bf16.mxu0 %v937
    %1331 = vmatpush1.bf16.msra.mxu0 %v936
    %1332 = vmatprep.subr.bf16.mxu0 %v941
    %1333 = vmatpush1.bf16.msra.mxu0 %v940
    %1334 = vmatprep.subr.bf16.mxu0 %v945
    %1335 = vmatpush1.bf16.msra.mxu0 %v944
    %1336 = vmatprep.subr.bf16.mxu0 %v949
    %1337 = vmatpush1.bf16.msra.mxu0 %v948
    %1338 = vmatprep.subr.bf16.mxu0 %v953
    %1339 = vmatpush1.bf16.msra.mxu0 %v952
    %1340 = vmatprep.subr.bf16.mxu0 %v957
    %1341 = vmatpush1.bf16.msra.mxu0 %v956
    %1342 = vmatprep.subr.bf16.mxu0 %v961
    %1343 = vmatpush1.bf16.msra.mxu0 %v960
    %1344 = vmatprep.subr.bf16.mxu0 %v965
    %1345 = vmatpush1.bf16.msra.mxu0 %v964
    %1346 = vmatprep.subr.bf16.mxu0 %v969
    %1347 = vmatpush1.bf16.msra.mxu0 %v968
    %1348 = vmatprep.subr.bf16.mxu0 %v973
    %1349 = vmatpush1.bf16.msra.mxu0 %v972
    %1350 = vmatprep.subr.bf16.mxu0 %v977
    %1351 = vmatpush1.bf16.msra.mxu0 %v976
    %1352 = vmatprep.subr.bf16.mxu0 %v981
    %1353 = vmatpush1.bf16.msra.mxu0 %v980
    %1354 = vmatprep.subr.bf16.mxu0 %v985
    %1355 = vmatpush1.bf16.msra.mxu0 %v984
    %1356 = vmatprep.subr.bf16.mxu0 %v989
    %1357 = vmatpush1.bf16.msra.mxu0 %v988
    %1358 = vmatprep.subr.bf16.mxu0 %v993
    %1359 = vmatpush1.bf16.msra.mxu0 %v992
    %1360 = vmatprep.mubr.bf16.mxu0 %v332
    %1361 = vmatmul.mubr.bf16.gmra.mrb[0].mxu0 %v331
    %v1362 = vpop.f32.mrb[0].mxu0
    %v1363 = vadd.f32 %v292, %v1362
    %v1364 = vpop.f32.mrb[0].mxu0
    %v1365 = vadd.f32 %v296, %v1364
    %v1366 = vpop.f32.mrb[0].mxu0
    %v1367 = vadd.f32 %v292, %v1366
    %v1368 = vpop.f32.mrb[0].mxu0
    %v1369 = vadd.f32 %v296, %v1368
    %1370 = vdwg.mxu0
    %1371 = vmatprep.subr.bf16.mxu0 %v997
    %1372 = vmatpush1.bf16.msra.mxu0 %v996
    %1373 = vmatprep.subr.bf16.mxu0 %v1001
    %1374 = vmatpush1.bf16.msra.mxu0 %v1000
    %1375 = vmatprep.subr.bf16.mxu0 %v1005
    %1376 = vmatpush1.bf16.msra.mxu0 %v1004
    %1377 = vmatprep.subr.bf16.mxu0 %v1009
    %1378 = vmatpush1.bf16.msra.mxu0 %v1008
    %1379 = vmatprep.subr.bf16.mxu0 %v1013
    %1380 = vmatpush1.bf16.msra.mxu0 %v1012
    %1381 = vmatprep.subr.bf16.mxu0 %v1017
    %1382 = vmatpush1.bf16.msra.mxu0 %v1016
    %1383 = vmatprep.subr.bf16.mxu0 %v1021
    %1384 = vmatpush1.bf16.msra.mxu0 %v1020
    %1385 = vmatprep.subr.bf16.mxu0 %v1025
    %1386 = vmatpush1.bf16.msra.mxu0 %v1024
    %1387 = vmatprep.subr.bf16.mxu0 %v1029
    %1388 = vmatpush1.bf16.msra.mxu0 %v1028
    %1389 = vmatprep.subr.bf16.mxu0 %v1033
    %1390 = vmatpush1.bf16.msra.mxu0 %v1032
    %1391 = vmatprep.subr.bf16.mxu0 %v1037
    %1392 = vmatpush1.bf16.msra.mxu0 %v1036
    %1393 = vmatprep.subr.bf16.mxu0 %v1041
    %1394 = vmatpush1.bf16.msra.mxu0 %v1040
    %1395 = vmatprep.subr.bf16.mxu0 %v1045
    %1396 = vmatpush1.bf16.msra.mxu0 %v1044
    %1397 = vmatprep.subr.bf16.mxu0 %v1049
    %1398 = vmatpush1.bf16.msra.mxu0 %v1048
    %1399 = vmatprep.subr.bf16.mxu0 %v1053
    %1400 = vmatpush1.bf16.msra.mxu0 %v1052
    %1401 = vmatprep.subr.bf16.mxu0 %v1057
    %1402 = vmatpush1.bf16.msra.mxu0 %v1056
    %1403 = vmatprep.mubr.bf16.mxu0 %v334
    %1404 = vmatmul.mubr.bf16.gmra.mrb[0].mxu0 %v333
    %v1405 = vpop.f32.mrb[0].mxu0
    %v1406 = vadd.f32 %v1363, %v1405
    %v1407 = vpop.f32.mrb[0].mxu0
    %v1408 = vadd.f32 %v1365, %v1407
    %v1409 = vpop.f32.mrb[0].mxu0
    %v1410 = vadd.f32 %v1367, %v1409
    %v1411 = vpop.f32.mrb[0].mxu0
    %v1412 = vadd.f32 %v1369, %v1411
    %1413 = vdwg.mxu0
    %1414 = vmatprep.subr.bf16.mxu0 %v1061
    %1415 = vmatpush1.bf16.msra.mxu0 %v1060
    %1416 = vmatprep.subr.bf16.mxu0 %v1065
    %1417 = vmatpush1.bf16.msra.mxu0 %v1064
    %1418 = vmatprep.subr.bf16.mxu0 %v1069
    %1419 = vmatpush1.bf16.msra.mxu0 %v1068
    %1420 = vmatprep.subr.bf16.mxu0 %v1073
    %1421 = vmatpush1.bf16.msra.mxu0 %v1072
    %1422 = vmatprep.subr.bf16.mxu0 %v1077
    %1423 = vmatpush1.bf16.msra.mxu0 %v1076
    %1424 = vmatprep.subr.bf16.mxu0 %v1081
    %1425 = vmatpush1.bf16.msra.mxu0 %v1080
    %1426 = vmatprep.subr.bf16.mxu0 %v1085
    %1427 = vmatpush1.bf16.msra.mxu0 %v1084
    %1428 = vmatprep.subr.bf16.mxu0 %v1089
    %1429 = vmatpush1.bf16.msra.mxu0 %v1088
    %1430 = vmatprep.subr.bf16.mxu0 %v1093
    %1431 = vmatpush1.bf16.msra.mxu0 %v1092
    %1432 = vmatprep.subr.bf16.mxu0 %v1097
    %1433 = vmatpush1.bf16.msra.mxu0 %v1096
    %1434 = vmatprep.subr.bf16.mxu0 %v1101
    %1435 = vmatpush1.bf16.msra.mxu0 %v1100
    %1436 = vmatprep.subr.bf16.mxu0 %v1105
    %1437 = vmatpush1.bf16.msra.mxu0 %v1104
    %1438 = vmatprep.subr.bf16.mxu0 %v1109
    %1439 = vmatpush1.bf16.msra.mxu0 %v1108
    %1440 = vmatprep.subr.bf16.mxu0 %v1113
    %1441 = vmatpush1.bf16.msra.mxu0 %v1112
    %1442 = vmatprep.subr.bf16.mxu0 %v1117
    %1443 = vmatpush1.bf16.msra.mxu0 %v1116
    %1444 = vmatprep.subr.bf16.mxu0 %v1121
    %1445 = vmatpush1.bf16.msra.mxu0 %v1120
    %1446 = vmatprep.mubr.bf16.mxu0 %v336
    %1447 = vmatmul.mubr.bf16.gmra.mrb[0].mxu0 %v335
    %v1448 = vpop.f32.mrb[0].mxu0
    %v1449 = vadd.f32 %v1406, %v1448
    %v1450 = vpop.f32.mrb[0].mxu0
    %v1451 = vadd.f32 %v1408, %v1450
    %v1452 = vpop.f32.mrb[0].mxu0
    %v1453 = vadd.f32 %v1410, %v1452
    %v1454 = vpop.f32.mrb[0].mxu0
    %v1455 = vadd.f32 %v1412, %v1454
    %1456 = vdwg.mxu0
    %1457 = vmatprep.subr.bf16.mxu0 %v1125
    %1458 = vmatpush1.bf16.msra.mxu0 %v1124
    %1459 = vmatprep.subr.bf16.mxu0 0
    %1460 = vmatpush1.bf16.msra.mxu0 0
    %1461 = vmatprep.subr.bf16.mxu0 0
    %1462 = vmatpush1.bf16.msra.mxu0 0
    %1463 = vmatprep.subr.bf16.mxu0 0
    %1464 = vmatpush1.bf16.msra.mxu0 0
    %1465 = vmatprep.subr.bf16.mxu0 0
    %1466 = vmatpush1.bf16.msra.mxu0 0
    %1467 = vmatprep.subr.bf16.mxu0 0
    %1468 = vmatpush1.bf16.msra.mxu0 0
    %1469 = vmatprep.subr.bf16.mxu0 0
    %1470 = vmatpush1.bf16.msra.mxu0 0
    %1471 = vmatprep.subr.bf16.mxu0 0
    %1472 = vmatpush1.bf16.msra.mxu0 0
    %1473 = vmatprep.subr.bf16.mxu0 0
    %1474 = vmatpush1.bf16.msra.mxu0 0
    %1475 = vmatprep.subr.bf16.mxu0 0
    %1476 = vmatpush1.bf16.msra.mxu0 0
    %1477 = vmatprep.subr.bf16.mxu0 0
    %1478 = vmatpush1.bf16.msra.mxu0 0
    %1479 = vmatprep.subr.bf16.mxu0 0
    %1480 = vmatpush1.bf16.msra.mxu0 0
    %1481 = vmatprep.subr.bf16.mxu0 0
    %1482 = vmatpush1.bf16.msra.mxu0 0
    %1483 = vmatprep.subr.bf16.mxu0 0
    %1484 = vmatpush1.bf16.msra.mxu0 0
    %1485 = vmatprep.subr.bf16.mxu0 0
    %1486 = vmatpush1.bf16.msra.mxu0 0
    %1487 = vmatprep.subr.bf16.mxu0 0
    %1488 = vmatpush1.bf16.msra.mxu0 0
    %1489 = vmatprep.mubr.bf16.mxu0 0
    %1490 = vmatmul.mubr.bf16.gmra.mrb[0].mxu0 %v1326
    %v1491 = vpop.f32.mrb[0].mxu0
    %v1492 = vadd.f32 %v1449, %v1491
    %v1493 = vpop.f32.mrb[0].mxu0
    %v1494 = vadd.f32 %v1451, %v1493
    %v1495 = vpop.f32.mrb[0].mxu0
    %v1496 = vadd.f32 %v1453, %v1495
    %v1497 = vpop.f32.mrb[0].mxu0
    %v1498 = vadd.f32 %v1455, %v1497
    %1499 = vdwg.mxu0
    %1500 = vmatprep.subr.bf16.mxu0 %v935
    %1501 = vmatpush1.bf16.msra.mxu0 %v934
    %1502 = vmatprep.subr.bf16.mxu0 %v939
    %1503 = vmatpush1.bf16.msra.mxu0 %v938
    %1504 = vmatprep.subr.bf16.mxu0 %v943
    %1505 = vmatpush1.bf16.msra.mxu0 %v942
    %1506 = vmatprep.subr.bf16.mxu0 %v947
    %1507 = vmatpush1.bf16.msra.mxu0 %v946
    %1508 = vmatprep.subr.bf16.mxu0 %v951
    %1509 = vmatpush1.bf16.msra.mxu0 %v950
    %1510 = vmatprep.subr.bf16.mxu0 %v955
    %1511 = vmatpush1.bf16.msra.mxu0 %v954
    %1512 = vmatprep.subr.bf16.mxu0 %v959
    %1513 = vmatpush1.bf16.msra.mxu0 %v958
    %1514 = vmatprep.subr.bf16.mxu0 %v963
    %1515 = vmatpush1.bf16.msra.mxu0 %v962
    %1516 = vmatprep.subr.bf16.mxu0 %v967
    %1517 = vmatpush1.bf16.msra.mxu0 %v966
    %1518 = vmatprep.subr.bf16.mxu0 %v971
    %1519 = vmatpush1.bf16.msra.mxu0 %v970
    %1520 = vmatprep.subr.bf16.mxu0 %v975
    %1521 = vmatpush1.bf16.msra.mxu0 %v974
    %1522 = vmatprep.subr.bf16.mxu0 %v979
    %1523 = vmatpush1.bf16.msra.mxu0 %v978
    %1524 = vmatprep.subr.bf16.mxu0 %v983
    %1525 = vmatpush1.bf16.msra.mxu0 %v982
    %1526 = vmatprep.subr.bf16.mxu0 %v987
    %1527 = vmatpush1.bf16.msra.mxu0 %v986
    %1528 = vmatprep.subr.bf16.mxu0 %v991
    %1529 = vmatpush1.bf16.msra.mxu0 %v990
    %1530 = vmatprep.subr.bf16.mxu0 %v995
    %1531 = vmatpush1.bf16.msra.mxu0 %v994
    %1532 = vmatprep.mubr.bf16.mxu0 %v332
    %1533 = vmatmul.mubr.bf16.gmra.mrb[0].mxu0 %v331
    %v1534 = vpop.f32.mrb[0].mxu0
    %v1535 = vadd.f32 %v300, %v1534
    %v1536 = vpop.f32.mrb[0].mxu0
    %v1537 = vadd.f32 %v304, %v1536
    %v1538 = vpop.f32.mrb[0].mxu0
    %v1539 = vadd.f32 %v300, %v1538
    %v1540 = vpop.f32.mrb[0].mxu0
    %v1541 = vadd.f32 %v304, %v1540
    %1542 = vdwg.mxu0
    %1543 = vmatprep.subr.bf16.mxu0 %v999
    %1544 = vmatpush1.bf16.msra.mxu0 %v998
    %1545 = vmatprep.subr.bf16.mxu0 %v1003
    %1546 = vmatpush1.bf16.msra.mxu0 %v1002
    %1547 = vmatprep.subr.bf16.mxu0 %v1007
    %1548 = vmatpush1.bf16.msra.mxu0 %v1006
    %1549 = vmatprep.subr.bf16.mxu0 %v1011
    %1550 = vmatpush1.bf16.msra.mxu0 %v1010
    %1551 = vmatprep.subr.bf16.mxu0 %v1015
    %1552 = vmatpush1.bf16.msra.mxu0 %v1014
    %1553 = vmatprep.subr.bf16.mxu0 %v1019
    %1554 = vmatpush1.bf16.msra.mxu0 %v1018
    %1555 = vmatprep.subr.bf16.mxu0 %v1023
    %1556 = vmatpush1.bf16.msra.mxu0 %v1022
    %1557 = vmatprep.subr.bf16.mxu0 %v1027
    %1558 = vmatpush1.bf16.msra.mxu0 %v1026
    %1559 = vmatprep.subr.bf16.mxu0 %v1031
    %1560 = vmatpush1.bf16.msra.mxu0 %v1030
    %1561 = vmatprep.subr.bf16.mxu0 %v1035
    %1562 = vmatpush1.bf16.msra.mxu0 %v1034
    %1563 = vmatprep.subr.bf16.mxu0 %v1039
    %1564 = vmatpush1.bf16.msra.mxu0 %v1038
    %1565 = vmatprep.subr.bf16.mxu0 %v1043
    %1566 = vmatpush1.bf16.msra.mxu0 %v1042
    %1567 = vmatprep.subr.bf16.mxu0 %v1047
    %1568 = vmatpush1.bf16.msra.mxu0 %v1046
    %1569 = vmatprep.subr.bf16.mxu0 %v1051
    %1570 = vmatpush1.bf16.msra.mxu0 %v1050
    %1571 = vmatprep.subr.bf16.mxu0 %v1055
    %1572 = vmatpush1.bf16.msra.mxu0 %v1054
    %1573 = vmatprep.subr.bf16.mxu0 %v1059
    %1574 = vmatpush1.bf16.msra.mxu0 %v1058
    %1575 = vmatprep.mubr.bf16.mxu0 %v334
    %1576 = vmatmul.mubr.bf16.gmra.mrb[0].mxu0 %v333
    %v1577 = vpop.f32.mrb[0].mxu0
    %v1578 = vadd.f32 %v1535, %v1577
    %v1579 = vpop.f32.mrb[0].mxu0
    %v1580 = vadd.f32 %v1537, %v1579
    %v1581 = vpop.f32.mrb[0].mxu0
    %v1582 = vadd.f32 %v1539, %v1581
    %v1583 = vpop.f32.mrb[0].mxu0
    %v1584 = vadd.f32 %v1541, %v1583
    %1585 = vdwg.mxu0
    %1586 = vmatprep.subr.bf16.mxu0 %v1063
    %1587 = vmatpush1.bf16.msra.mxu0 %v1062
    %1588 = vmatprep.subr.bf16.mxu0 %v1067
    %1589 = vmatpush1.bf16.msra.mxu0 %v1066
    %1590 = vmatprep.subr.bf16.mxu0 %v1071
    %1591 = vmatpush1.bf16.msra.mxu0 %v1070
    %1592 = vmatprep.subr.bf16.mxu0 %v1075
    %1593 = vmatpush1.bf16.msra.mxu0 %v1074
    %1594 = vmatprep.subr.bf16.mxu0 %v1079
    %1595 = vmatpush1.bf16.msra.mxu0 %v1078
    %1596 = vmatprep.subr.bf16.mxu0 %v1083
    %1597 = vmatpush1.bf16.msra.mxu0 %v1082
    %1598 = vmatprep.subr.bf16.mxu0 %v1087
    %1599 = vmatpush1.bf16.msra.mxu0 %v1086
    %1600 = vmatprep.subr.bf16.mxu0 %v1091
    %1601 = vmatpush1.bf16.msra.mxu0 %v1090
    %1602 = vmatprep.subr.bf16.mxu0 %v1095
    %1603 = vmatpush1.bf16.msra.mxu0 %v1094
    %1604 = vmatprep.subr.bf16.mxu0 %v1099
    %1605 = vmatpush1.bf16.msra.mxu0 %v1098
    %1606 = vmatprep.subr.bf16.mxu0 %v1103
    %1607 = vmatpush1.bf16.msra.mxu0 %v1102
    %1608 = vmatprep.subr.bf16.mxu0 %v1107
    %1609 = vmatpush1.bf16.msra.mxu0 %v1106
    %1610 = vmatprep.subr.bf16.mxu0 %v1111
    %1611 = vmatpush1.bf16.msra.mxu0 %v1110
    %1612 = vmatprep.subr.bf16.mxu0 %v1115
    %1613 = vmatpush1.bf16.msra.mxu0 %v1114
    %1614 = vmatprep.subr.bf16.mxu0 %v1119
    %1615 = vmatpush1.bf16.msra.mxu0 %v1118
    %1616 = vmatprep.subr.bf16.mxu0 %v1123
    %1617 = vmatpush1.bf16.msra.mxu0 %v1122
    %1618 = vmatprep.mubr.bf16.mxu0 %v336
    %1619 = vmatmul.mubr.bf16.gmra.mrb[0].mxu0 %v335
    %v1620 = vpop.f32.mrb[0].mxu0
    %v1621 = vadd.f32 %v1578, %v1620
    %v1622 = vpop.f32.mrb[0].mxu0
    %v1623 = vadd.f32 %v1580, %v1622
    %v1624 = vpop.f32.mrb[0].mxu0
    %v1625 = vadd.f32 %v1582, %v1624
    %v1626 = vpop.f32.mrb[0].mxu0
    %v1627 = vadd.f32 %v1584, %v1626
    %1628 = vdwg.mxu0
    %1629 = vmatprep.subr.bf16.mxu0 %v1127
    %1630 = vmatpush1.bf16.msra.mxu0 %v1126
    %1631 = vmatprep.subr.bf16.mxu0 0
    %1632 = vmatpush1.bf16.msra.mxu0 0
    %1633 = vmatprep.subr.bf16.mxu0 0
    %1634 = vmatpush1.bf16.msra.mxu0 0
    %1635 = vmatprep.subr.bf16.mxu0 0
    %1636 = vmatpush1.bf16.msra.mxu0 0
    %1637 = vmatprep.subr.bf16.mxu0 0
    %1638 = vmatpush1.bf16.msra.mxu0 0
    %1639 = vmatprep.subr.bf16.mxu0 0
    %1640 = vmatpush1.bf16.msra.mxu0 0
    %1641 = vmatprep.subr.bf16.mxu0 0
    %1642 = vmatpush1.bf16.msra.mxu0 0
    %1643 = vmatprep.subr.bf16.mxu0 0
    %1644 = vmatpush1.bf16.msra.mxu0 0
    %1645 = vmatprep.subr.bf16.mxu0 0
    %1646 = vmatpush1.bf16.msra.mxu0 0
    %1647 = vmatprep.subr.bf16.mxu0 0
    %1648 = vmatpush1.bf16.msra.mxu0 0
    %1649 = vmatprep.subr.bf16.mxu0 0
    %1650 = vmatpush1.bf16.msra.mxu0 0
    %1651 = vmatprep.subr.bf16.mxu0 0
    %1652 = vmatpush1.bf16.msra.mxu0 0
    %1653 = vmatprep.subr.bf16.mxu0 0
    %1654 = vmatpush1.bf16.msra.mxu0 0
    %1655 = vmatprep.subr.bf16.mxu0 0
    %1656 = vmatpush1.bf16.msra.mxu0 0
    %1657 = vmatprep.subr.bf16.mxu0 0
    %1658 = vmatpush1.bf16.msra.mxu0 0
    %1659 = vmatprep.subr.bf16.mxu0 0
    %1660 = vmatpush1.bf16.msra.mxu0 0
    %1661 = vmatprep.mubr.bf16.mxu0 0
    %1662 = vmatmul.mubr.bf16.gmra.mrb[0].mxu0 %v1326
    %v1663 = vpop.f32.mrb[0].mxu0
    %v1664 = vadd.f32 %v1621, %v1663
    %v1665 = vpop.f32.mrb[0].mxu0
    %v1666 = vadd.f32 %v1623, %v1665
    %v1667 = vpop.f32.mrb[0].mxu0
    %v1668 = vadd.f32 %v1625, %v1667
    %v1669 = vpop.f32.mrb[0].mxu0
    %v1670 = vadd.f32 %v1627, %v1669
    %1671 = vdwg.mxu0
    %v1672 = vmax.f32 %v1492, 0.0
    %v1673 = vmax.f32 %v1494, 0.0
    %v1674 = vmax.f32 %v1664, 0.0
    %v1675 = vmax.f32 %v1666, 0.0
    %v1676 = vmax.f32 %v1496, 0.0
    %v1677 = vmax.f32 %v1498, 0.0
    %v1678 = vmax.f32 %v1668, 0.0
    %v1679 = vmax.f32 %v1670, 0.0
    %v1680 = vpack.c.bf16 %v1676, %v1672
    %v1681 = vpack.c.bf16 %v1677, %v1673
    %v1682 = vpack.c.bf16 %v1678, %v1674
    %v1683 = vpack.c.bf16 %v1679, %v1675
    %v1684 = vld [vmem:[#allocation7] sm:$0xff]
    %v1685 = vld [vmem:[#allocation7 + $0x8] sm:$0xff]
    %v1686 = vld [vmem:[#allocation7 + $0x10] sm:$0xff]
    %v1687 = vld [vmem:[#allocation7 + $0x18] sm:$0xff]
    %v1688 = vld [vmem:[#allocation7 + $0x20] sm:$0xff]
    %v1689 = vld [vmem:[#allocation7 + $0x28] sm:$0xff]
    %v1690 = vld [vmem:[#allocation7 + $0x30] sm:$0xff]
    %v1691 = vld [vmem:[#allocation7 + $0x38] sm:$0xff]
    %v1692 = vld [vmem:[#allocation7 + $0x40] sm:$0xff]
    %v1693 = vld [vmem:[#allocation7 + $0x48] sm:$0xff]
    %v1694 = vld [vmem:[#allocation7 + $0x50] sm:$0xff]
    %v1695 = vld [vmem:[#allocation7 + $0x58] sm:$0xff]
    %v1696 = vld [vmem:[#allocation7 + $0x60] sm:$0xff]
    %v1697 = vld [vmem:[#allocation7 + $0x68] sm:$0xff]
    %v1698 = vld [vmem:[#allocation7 + $0x70] sm:$0xff]
    %v1699 = vld [vmem:[#allocation7 + $0x78] sm:$0xff]
    %v1700 = vld [vmem:[#allocation7 + $0x80] sm:$0xff]
    %v1701 = vld [vmem:[#allocation7 + $0x88] sm:$0xff]
    %v1702 = vld [vmem:[#allocation7 + $0x90] sm:$0xff]
    %v1703 = vld [vmem:[#allocation7 + $0x98] sm:$0xff]
    %v1704 = vld [vmem:[#allocation7 + $0xa0] sm:$0xff]
    %v1705 = vld [vmem:[#allocation7 + $0xa8] sm:$0xff]
    %v1706 = vld [vmem:[#allocation7 + $0xb0] sm:$0xff]
    %v1707 = vld [vmem:[#allocation7 + $0xb8] sm:$0xff]
    %v1708 = vld [vmem:[#allocation7 + $0xc0] sm:$0xff]
    %v1709 = vld [vmem:[#allocation7 + $0xc8] sm:$0xff]
    %v1710 = vld [vmem:[#allocation7 + $0xd0] sm:$0xff]
    %v1711 = vld [vmem:[#allocation7 + $0xd8] sm:$0xff]
    %v1712 = vld [vmem:[#allocation7 + $0xe0] sm:$0xff]
    %v1713 = vld [vmem:[#allocation7 + $0xe8] sm:$0xff]
    %v1714 = vld [vmem:[#allocation7 + $0xf0] sm:$0xff]
    %v1715 = vld [vmem:[#allocation7 + $0xf8] sm:$0xff]
    %v1716 = vld [vmem:[#allocation7 + $0x100] sm:$0xff]
    %v1717 = vld [vmem:[#allocation7 + $0x108] sm:$0xff]
    %v1718 = vld [vmem:[#allocation7 + $0x110] sm:$0xff]
    %v1719 = vld [vmem:[#allocation7 + $0x118] sm:$0xff]
    %v1720 = vld [vmem:[#allocation7 + $0x120] sm:$0xff]
    %v1721 = vld [vmem:[#allocation7 + $0x128] sm:$0xff]
    %v1722 = vld [vmem:[#allocation7 + $0x130] sm:$0xff]
    %v1723 = vld [vmem:[#allocation7 + $0x138] sm:$0xff]
    %v1724 = vld [vmem:[#allocation7 + $0x140] sm:$0xff]
    %v1725 = vld [vmem:[#allocation7 + $0x148] sm:$0xff]
    %v1726 = vld [vmem:[#allocation7 + $0x150] sm:$0xff]
    %v1727 = vld [vmem:[#allocation7 + $0x158] sm:$0xff]
    %v1728 = vld [vmem:[#allocation7 + $0x160] sm:$0xff]
    %v1729 = vld [vmem:[#allocation7 + $0x168] sm:$0xff]
    %v1730 = vld [vmem:[#allocation7 + $0x170] sm:$0xff]
    %v1731 = vld [vmem:[#allocation7 + $0x178] sm:$0xff]
    %v1732 = vld [vmem:[#allocation7 + $0x180] sm:$0xff]
    %v1733 = vld [vmem:[#allocation7 + $0x188] sm:$0xff]
    %v1734 = vld [vmem:[#allocation7 + $0x190] sm:$0xff]
    %v1735 = vld [vmem:[#allocation7 + $0x198] sm:$0xff]
    %v1736 = vld [vmem:[#allocation7 + $0x1a0] sm:$0xff]
    %v1737 = vld [vmem:[#allocation7 + $0x1a8] sm:$0xff]
    %v1738 = vld [vmem:[#allocation7 + $0x1b0] sm:$0xff]
    %v1739 = vld [vmem:[#allocation7 + $0x1b8] sm:$0xff]
    %v1740 = vld [vmem:[#allocation7 + $0x1c0] sm:$0xff]
    %v1741 = vld [vmem:[#allocation7 + $0x1c8] sm:$0xff]
    %v1742 = vld [vmem:[#allocation7 + $0x1d0] sm:$0xff]
    %v1743 = vld [vmem:[#allocation7 + $0x1d8] sm:$0xff]
    %v1744 = vld [vmem:[#allocation7 + $0x1e0] sm:$0xff]
    %v1745 = vld [vmem:[#allocation7 + $0x1e8] sm:$0xff]
    %v1746 = vld [vmem:[#allocation7 + $0x1f0] sm:$0xff]
    %v1747 = vld [vmem:[#allocation7 + $0x1f8] sm:$0xff]
    %v1748 = vld [vmem:[%s4] sm:$0x3]
    %v1750 = vlaneseq
    %v1751 = vshrl.u32 %v1750, 7
    %v1752 = vsub.s32 0, %v1751
    %v1753 = vrot.slane %v1748, %v1752
    %v1754 = vlaneseq
    %v1755 = vshrl.u32 %v1754, 7
    %v1756 = vsub.s32 1, %v1755
    %v1757 = vrot.slane %v1748, %v1756
    %v1824 = vunpack.c.l.b16 %v1684
    %v1825 = vunpack.c.h.b16 %v1684
    %v1826 = vunpack.c.l.b16 %v1685
    %v1827 = vunpack.c.h.b16 %v1685
    %v1828 = vunpack.c.l.b16 %v1686
    %v1829 = vunpack.c.h.b16 %v1686
    %v1830 = vunpack.c.l.b16 %v1687
    %v1831 = vunpack.c.h.b16 %v1687
    %v1832 = vunpack.c.l.b16 %v1688
    %v1833 = vunpack.c.h.b16 %v1688
    %v1834 = vunpack.c.l.b16 %v1689
    %v1835 = vunpack.c.h.b16 %v1689
    %v1836 = vunpack.c.l.b16 %v1690
    %v1837 = vunpack.c.h.b16 %v1690
    %v1838 = vunpack.c.l.b16 %v1691
    %v1839 = vunpack.c.h.b16 %v1691
    %v1840 = vunpack.c.l.b16 %v1692
    %v1841 = vunpack.c.h.b16 %v1692
    %v1842 = vunpack.c.l.b16 %v1693
    %v1843 = vunpack.c.h.b16 %v1693
    %v1844 = vunpack.c.l.b16 %v1694
    %v1845 = vunpack.c.h.b16 %v1694
    %v1846 = vunpack.c.l.b16 %v1695
    %v1847 = vunpack.c.h.b16 %v1695
    %v1848 = vunpack.c.l.b16 %v1696
    %v1849 = vunpack.c.h.b16 %v1696
    %v1850 = vunpack.c.l.b16 %v1697
    %v1851 = vunpack.c.h.b16 %v1697
    %v1852 = vunpack.c.l.b16 %v1698
    %v1853 = vunpack.c.h.b16 %v1698
    %v1854 = vunpack.c.l.b16 %v1699
    %v1855 = vunpack.c.h.b16 %v1699
    %v1856 = vunpack.c.l.b16 %v1700
    %v1857 = vunpack.c.h.b16 %v1700
    %v1858 = vunpack.c.l.b16 %v1701
    %v1859 = vunpack.c.h.b16 %v1701
    %v1860 = vunpack.c.l.b16 %v1702
    %v1861 = vunpack.c.h.b16 %v1702
    %v1862 = vunpack.c.l.b16 %v1703
    %v1863 = vunpack.c.h.b16 %v1703
    %v1864 = vunpack.c.l.b16 %v1704
    %v1865 = vunpack.c.h.b16 %v1704
    %v1866 = vunpack.c.l.b16 %v1705
    %v1867 = vunpack.c.h.b16 %v1705
    %v1868 = vunpack.c.l.b16 %v1706
    %v1869 = vunpack.c.h.b16 %v1706
    %v1870 = vunpack.c.l.b16 %v1707
    %v1871 = vunpack.c.h.b16 %v1707
    %v1872 = vunpack.c.l.b16 %v1708
    %v1873 = vunpack.c.h.b16 %v1708
    %v1874 = vunpack.c.l.b16 %v1709
    %v1875 = vunpack.c.h.b16 %v1709
    %v1876 = vunpack.c.l.b16 %v1710
    %v1877 = vunpack.c.h.b16 %v1710
    %v1878 = vunpack.c.l.b16 %v1711
    %v1879 = vunpack.c.h.b16 %v1711
    %v1880 = vunpack.c.l.b16 %v1712
    %v1881 = vunpack.c.h.b16 %v1712
    %v1882 = vunpack.c.l.b16 %v1713
    %v1883 = vunpack.c.h.b16 %v1713
    %v1884 = vunpack.c.l.b16 %v1714
    %v1885 = vunpack.c.h.b16 %v1714
    %v1886 = vunpack.c.l.b16 %v1715
    %v1887 = vunpack.c.h.b16 %v1715
    %v1888 = vunpack.c.l.b16 %v1716
    %v1889 = vunpack.c.h.b16 %v1716
    %v1890 = vunpack.c.l.b16 %v1717
    %v1891 = vunpack.c.h.b16 %v1717
    %v1892 = vunpack.c.l.b16 %v1718
    %v1893 = vunpack.c.h.b16 %v1718
    %v1894 = vunpack.c.l.b16 %v1719
    %v1895 = vunpack.c.h.b16 %v1719
    %v1896 = vunpack.c.l.b16 %v1720
    %v1897 = vunpack.c.h.b16 %v1720
    %v1898 = vunpack.c.l.b16 %v1721
    %v1899 = vunpack.c.h.b16 %v1721
    %v1900 = vunpack.c.l.b16 %v1722
    %v1901 = vunpack.c.h.b16 %v1722
    %v1902 = vunpack.c.l.b16 %v1723
    %v1903 = vunpack.c.h.b16 %v1723
    %v1904 = vunpack.c.l.b16 %v1724
    %v1905 = vunpack.c.h.b16 %v1724
    %v1906 = vunpack.c.l.b16 %v1725
    %v1907 = vunpack.c.h.b16 %v1725
    %v1908 = vunpack.c.l.b16 %v1726
    %v1909 = vunpack.c.h.b16 %v1726
    %v1910 = vunpack.c.l.b16 %v1727
    %v1911 = vunpack.c.h.b16 %v1727
    %v1912 = vunpack.c.l.b16 %v1728
    %v1913 = vunpack.c.h.b16 %v1728
    %v1914 = vunpack.c.l.b16 %v1729
    %v1915 = vunpack.c.h.b16 %v1729
    %v1916 = vunpack.c.l.b16 %v1730
    %v1917 = vunpack.c.h.b16 %v1730
    %v1918 = vunpack.c.l.b16 %v1731
    %v1919 = vunpack.c.h.b16 %v1731
    %v1920 = vunpack.c.l.b16 %v1732
    %v1921 = vunpack.c.h.b16 %v1732
    %v1922 = vunpack.c.l.b16 %v1733
    %v1923 = vunpack.c.h.b16 %v1733
    %v1924 = vunpack.c.l.b16 %v1734
    %v1925 = vunpack.c.h.b16 %v1734
    %v1926 = vunpack.c.l.b16 %v1735
    %v1927 = vunpack.c.h.b16 %v1735
    %v1928 = vunpack.c.l.b16 %v1736
    %v1929 = vunpack.c.h.b16 %v1736
    %v1930 = vunpack.c.l.b16 %v1737
    %v1931 = vunpack.c.h.b16 %v1737
    %v1932 = vunpack.c.l.b16 %v1738
    %v1933 = vunpack.c.h.b16 %v1738
    %v1934 = vunpack.c.l.b16 %v1739
    %v1935 = vunpack.c.h.b16 %v1739
    %v1936 = vunpack.c.l.b16 %v1740
    %v1937 = vunpack.c.h.b16 %v1740
    %v1938 = vunpack.c.l.b16 %v1741
    %v1939 = vunpack.c.h.b16 %v1741
    %v1940 = vunpack.c.l.b16 %v1742
    %v1941 = vunpack.c.h.b16 %v1742
    %v1942 = vunpack.c.l.b16 %v1743
    %v1943 = vunpack.c.h.b16 %v1743
    %v1944 = vunpack.c.l.b16 %v1744
    %v1945 = vunpack.c.h.b16 %v1744
    %v1946 = vunpack.c.l.b16 %v1745
    %v1947 = vunpack.c.h.b16 %v1745
    %v1948 = vunpack.c.l.b16 %v1746
    %v1949 = vunpack.c.h.b16 %v1746
    %v1950 = vunpack.c.l.b16 %v1747
    %v1951 = vunpack.c.h.b16 %v1747
    %v1952 = vpack.c.b16 %v1826, %v1824
    %v1953 = vpack.c.b16 %v1827, %v1825
    %v1954 = vpack.c.b16 %v1830, %v1828
    %v1955 = vpack.c.b16 %v1831, %v1829
    %v1956 = vpack.c.b16 %v1834, %v1832
    %v1957 = vpack.c.b16 %v1835, %v1833
    %v1958 = vpack.c.b16 %v1838, %v1836
    %v1959 = vpack.c.b16 %v1839, %v1837
    %v1960 = vpack.c.b16 %v1842, %v1840
    %v1961 = vpack.c.b16 %v1843, %v1841
    %v1962 = vpack.c.b16 %v1846, %v1844
    %v1963 = vpack.c.b16 %v1847, %v1845
    %v1964 = vpack.c.b16 %v1850, %v1848
    %v1965 = vpack.c.b16 %v1851, %v1849
    %v1966 = vpack.c.b16 %v1854, %v1852
    %v1967 = vpack.c.b16 %v1855, %v1853
    %v1968 = vpack.c.b16 %v1858, %v1856
    %v1969 = vpack.c.b16 %v1859, %v1857
    %v1970 = vpack.c.b16 %v1862, %v1860
    %v1971 = vpack.c.b16 %v1863, %v1861
    %v1972 = vpack.c.b16 %v1866, %v1864
    %v1973 = vpack.c.b16 %v1867, %v1865
    %v1974 = vpack.c.b16 %v1870, %v1868
    %v1975 = vpack.c.b16 %v1871, %v1869
    %v1976 = vpack.c.b16 %v1874, %v1872
    %v1977 = vpack.c.b16 %v1875, %v1873
    %v1978 = vpack.c.b16 %v1878, %v1876
    %v1979 = vpack.c.b16 %v1879, %v1877
    %v1980 = vpack.c.b16 %v1882, %v1880
    %v1981 = vpack.c.b16 %v1883, %v1881
    %v1982 = vpack.c.b16 %v1886, %v1884
    %v1983 = vpack.c.b16 %v1887, %v1885
    %v1984 = vpack.c.b16 %v1890, %v1888
    %v1985 = vpack.c.b16 %v1891, %v1889
    %v1986 = vpack.c.b16 %v1894, %v1892
    %v1987 = vpack.c.b16 %v1895, %v1893
    %v1988 = vpack.c.b16 %v1898, %v1896
    %v1989 = vpack.c.b16 %v1899, %v1897
    %v1990 = vpack.c.b16 %v1902, %v1900
    %v1991 = vpack.c.b16 %v1903, %v1901
    %v1992 = vpack.c.b16 %v1906, %v1904
    %v1993 = vpack.c.b16 %v1907, %v1905
    %v1994 = vpack.c.b16 %v1910, %v1908
    %v1995 = vpack.c.b16 %v1911, %v1909
    %v1996 = vpack.c.b16 %v1914, %v1912
    %v1997 = vpack.c.b16 %v1915, %v1913
    %v1998 = vpack.c.b16 %v1918, %v1916
    %v1999 = vpack.c.b16 %v1919, %v1917
    %v2000 = vpack.c.b16 %v1922, %v1920
    %v2001 = vpack.c.b16 %v1923, %v1921
    %v2002 = vpack.c.b16 %v1926, %v1924
    %v2003 = vpack.c.b16 %v1927, %v1925
    %v2004 = vpack.c.b16 %v1930, %v1928
    %v2005 = vpack.c.b16 %v1931, %v1929
    %v2006 = vpack.c.b16 %v1934, %v1932
    %v2007 = vpack.c.b16 %v1935, %v1933
    %v2008 = vpack.c.b16 %v1938, %v1936
    %v2009 = vpack.c.b16 %v1939, %v1937
    %v2010 = vpack.c.b16 %v1942, %v1940
    %v2011 = vpack.c.b16 %v1943, %v1941
    %v2012 = vpack.c.b16 %v1946, %v1944
    %v2013 = vpack.c.b16 %v1947, %v1945
    %v2014 = vpack.c.b16 %v1950, %v1948
    %v2015 = vpack.c.b16 %v1951, %v1949
    %2080 = vmatprep.subr.bf16.mxu0 %v1953
    %2081 = vmatpush1.bf16.msra.mxu0 %v1952
    %2082 = vmatprep.subr.bf16.mxu0 %v1955
    %2083 = vmatpush1.bf16.msra.mxu0 %v1954
    %2084 = vmatprep.subr.bf16.mxu0 %v1957
    %2085 = vmatpush1.bf16.msra.mxu0 %v1956
    %2086 = vmatprep.subr.bf16.mxu0 %v1959
    %2087 = vmatpush1.bf16.msra.mxu0 %v1958
    %2088 = vmatprep.subr.bf16.mxu0 %v1961
    %2089 = vmatpush1.bf16.msra.mxu0 %v1960
    %2090 = vmatprep.subr.bf16.mxu0 %v1963
    %2091 = vmatpush1.bf16.msra.mxu0 %v1962
    %2092 = vmatprep.subr.bf16.mxu0 %v1965
    %2093 = vmatpush1.bf16.msra.mxu0 %v1964
    %2094 = vmatprep.subr.bf16.mxu0 %v1967
    %2095 = vmatpush1.bf16.msra.mxu0 %v1966
    %2096 = vmatprep.subr.bf16.mxu0 %v1969
    %2097 = vmatpush1.bf16.msra.mxu0 %v1968
    %2098 = vmatprep.subr.bf16.mxu0 %v1971
    %2099 = vmatpush1.bf16.msra.mxu0 %v1970
    %2100 = vmatprep.subr.bf16.mxu0 %v1973
    %2101 = vmatpush1.bf16.msra.mxu0 %v1972
    %2102 = vmatprep.subr.bf16.mxu0 %v1975
    %2103 = vmatpush1.bf16.msra.mxu0 %v1974
    %2104 = vmatprep.subr.bf16.mxu0 %v1977
    %2105 = vmatpush1.bf16.msra.mxu0 %v1976
    %2106 = vmatprep.subr.bf16.mxu0 %v1979
    %2107 = vmatpush1.bf16.msra.mxu0 %v1978
    %2108 = vmatprep.subr.bf16.mxu0 %v1981
    %2109 = vmatpush1.bf16.msra.mxu0 %v1980
    %2110 = vmatprep.subr.bf16.mxu0 %v1983
    %2111 = vmatpush1.bf16.msra.mxu0 %v1982
    %2112 = vmatprep.mubr.bf16.mxu0 %v1681
    %2113 = vmatmul.mubr.bf16.gmra.mrb[0].mxu0 %v1680
    %v2114 = vpop.f32.mrb[0].mxu0
    %v2115 = vadd.f32 %v1753, %v2114
    %v2116 = vpop.f32.mrb[0].mxu0
    %v2117 = vadd.f32 %v1757, %v2116
    %v2118 = vpop.f32.mrb[0].mxu0
    %v2119 = vadd.f32 %v1753, %v2118
    %v2120 = vpop.f32.mrb[0].mxu0
    %v2121 = vadd.f32 %v1757, %v2120
    %2122 = vdwg.mxu0
    %2123 = vmatprep.subr.bf16.mxu0 %v1985
    %2124 = vmatpush1.bf16.msra.mxu0 %v1984
    %2125 = vmatprep.subr.bf16.mxu0 %v1987
    %2126 = vmatpush1.bf16.msra.mxu0 %v1986
    %2127 = vmatprep.subr.bf16.mxu0 %v1989
    %2128 = vmatpush1.bf16.msra.mxu0 %v1988
    %2129 = vmatprep.subr.bf16.mxu0 %v1991
    %2130 = vmatpush1.bf16.msra.mxu0 %v1990
    %2131 = vmatprep.subr.bf16.mxu0 %v1993
    %2132 = vmatpush1.bf16.msra.mxu0 %v1992
    %2133 = vmatprep.subr.bf16.mxu0 %v1995
    %2134 = vmatpush1.bf16.msra.mxu0 %v1994
    %2135 = vmatprep.subr.bf16.mxu0 %v1997
    %2136 = vmatpush1.bf16.msra.mxu0 %v1996
    %2137 = vmatprep.subr.bf16.mxu0 %v1999
    %2138 = vmatpush1.bf16.msra.mxu0 %v1998
    %2139 = vmatprep.subr.bf16.mxu0 %v2001
    %2140 = vmatpush1.bf16.msra.mxu0 %v2000
    %2141 = vmatprep.subr.bf16.mxu0 %v2003
    %2142 = vmatpush1.bf16.msra.mxu0 %v2002
    %2143 = vmatprep.subr.bf16.mxu0 %v2005
    %2144 = vmatpush1.bf16.msra.mxu0 %v2004
    %2145 = vmatprep.subr.bf16.mxu0 %v2007
    %2146 = vmatpush1.bf16.msra.mxu0 %v2006
    %2147 = vmatprep.subr.bf16.mxu0 %v2009
    %2148 = vmatpush1.bf16.msra.mxu0 %v2008
    %2149 = vmatprep.subr.bf16.mxu0 %v2011
    %2150 = vmatpush1.bf16.msra.mxu0 %v2010
    %2151 = vmatprep.subr.bf16.mxu0 %v2013
    %2152 = vmatpush1.bf16.msra.mxu0 %v2012
    %2153 = vmatprep.subr.bf16.mxu0 %v2015
    %2154 = vmatpush1.bf16.msra.mxu0 %v2014
    %2155 = vmatprep.mubr.bf16.mxu0 %v1683
    %2156 = vmatmul.mubr.bf16.gmra.mrb[0].mxu0 %v1682
    %v2157 = vpop.f32.mrb[0].mxu0
    %v2158 = vadd.f32 %v2115, %v2157
    %v2159 = vpop.f32.mrb[0].mxu0
    %v2160 = vadd.f32 %v2117, %v2159
    %v2161 = vpop.f32.mrb[0].mxu0
    %v2162 = vadd.f32 %v2119, %v2161
    %v2163 = vpop.f32.mrb[0].mxu0
    %v2164 = vadd.f32 %v2121, %v2163
    %2165 = vdwg.mxu0
    %v2166 = vmax.f32 %v2158, 0.0
    %v2167 = vmax.f32 %v2160, 0.0
    %v2168 = vmax.f32 %v2162, 0.0
    %v2169 = vmax.f32 %v2164, 0.0
    %v2170 = vpack.c.bf16 %v2168, %v2166
    %v2171 = vpack.c.bf16 %v2169, %v2167
    %v2172 = vld [vmem:[#allocation8] sm:$0xf]
    %v2173 = vld [vmem:[#allocation8 + $0x4] sm:$0xf]
    %v2174 = vld [vmem:[#allocation8 + $0x8] sm:$0xf]
    %v2175 = vld [vmem:[#allocation8 + $0xc] sm:$0xf]
    %v2176 = vld [vmem:[#allocation8 + $0x10] sm:$0xf]
    %v2177 = vld [vmem:[#allocation8 + $0x14] sm:$0xf]
    %v2178 = vld [vmem:[#allocation8 + $0x18] sm:$0xf]
    %v2179 = vld [vmem:[#allocation8 + $0x1c] sm:$0xf]
    %v2180 = vld [vmem:[#allocation8 + $0x20] sm:$0xf]
    %v2181 = vld [vmem:[#allocation8 + $0x24] sm:$0xf]
    %v2182 = vld [vmem:[#allocation8 + $0x28] sm:$0xf]
    %v2183 = vld [vmem:[#allocation8 + $0x2c] sm:$0xf]
    %v2184 = vld [vmem:[#allocation8 + $0x30] sm:$0xf]
    %v2185 = vld [vmem:[#allocation8 + $0x34] sm:$0xf]
    %v2186 = vld [vmem:[#allocation8 + $0x38] sm:$0xf]
    %v2187 = vld [vmem:[#allocation8 + $0x3c] sm:$0xf]
    %v2188 = vld [vmem:[#allocation8 + $0x40] sm:$0xf]
    %v2189 = vld [vmem:[#allocation8 + $0x44] sm:$0xf]
    %v2190 = vld [vmem:[#allocation8 + $0x48] sm:$0xf]
    %v2191 = vld [vmem:[#allocation8 + $0x4c] sm:$0xf]
    %v2192 = vld [vmem:[#allocation8 + $0x50] sm:$0xf]
    %v2193 = vld [vmem:[#allocation8 + $0x54] sm:$0xf]
    %v2194 = vld [vmem:[#allocation8 + $0x58] sm:$0xf]
    %v2195 = vld [vmem:[#allocation8 + $0x5c] sm:$0xf]
    %v2196 = vld [vmem:[#allocation8 + $0x60] sm:$0xf]
    %v2197 = vld [vmem:[#allocation8 + $0x64] sm:$0xf]
    %v2198 = vld [vmem:[#allocation8 + $0x68] sm:$0xf]
    %v2199 = vld [vmem:[#allocation8 + $0x6c] sm:$0xf]
    %v2200 = vld [vmem:[#allocation8 + $0x70] sm:$0xf]
    %v2201 = vld [vmem:[#allocation8 + $0x74] sm:$0xf]
    %v2202 = vld [vmem:[#allocation8 + $0x78] sm:$0xf]
    %v2203 = vld [vmem:[#allocation8 + $0x7c] sm:$0xf]
    %v2204 = vld [vmem:[%s6] sm:$0x1]
    %v2206 = vlaneseq
    %v2207 = vshrl.u32 %v2206, 7
    %v2208 = vsub.s32 0, %v2207
    %v2209 = vrot.slane %v2204, %v2208
    %v2243 = vunpack.c.l.b16 %v2172
    %v2244 = vunpack.c.l.b16 %v2173
    %v2245 = vunpack.c.l.b16 %v2174
    %v2246 = vunpack.c.l.b16 %v2175
    %v2247 = vunpack.c.l.b16 %v2176
    %v2248 = vunpack.c.l.b16 %v2177
    %v2249 = vunpack.c.l.b16 %v2178
    %v2250 = vunpack.c.l.b16 %v2179
    %v2251 = vunpack.c.l.b16 %v2180
    %v2252 = vunpack.c.l.b16 %v2181
    %v2253 = vunpack.c.l.b16 %v2182
    %v2254 = vunpack.c.l.b16 %v2183
    %v2255 = vunpack.c.l.b16 %v2184
    %v2256 = vunpack.c.l.b16 %v2185
    %v2257 = vunpack.c.l.b16 %v2186
    %v2258 = vunpack.c.l.b16 %v2187
    %v2259 = vunpack.c.l.b16 %v2188
    %v2260 = vunpack.c.l.b16 %v2189
    %v2261 = vunpack.c.l.b16 %v2190
    %v2262 = vunpack.c.l.b16 %v2191
    %v2263 = vunpack.c.l.b16 %v2192
    %v2264 = vunpack.c.l.b16 %v2193
    %v2265 = vunpack.c.l.b16 %v2194
    %v2266 = vunpack.c.l.b16 %v2195
    %v2267 = vunpack.c.l.b16 %v2196
    %v2268 = vunpack.c.l.b16 %v2197
    %v2269 = vunpack.c.l.b16 %v2198
    %v2270 = vunpack.c.l.b16 %v2199
    %v2271 = vunpack.c.l.b16 %v2200
    %v2272 = vunpack.c.l.b16 %v2201
    %v2273 = vunpack.c.l.b16 %v2202
    %v2274 = vunpack.c.l.b16 %v2203
    %v2275 = vpack.c.b16 %v2244, %v2243
    %v2276 = vpack.c.b16 %v2246, %v2245
    %v2277 = vpack.c.b16 %v2248, %v2247
    %v2278 = vpack.c.b16 %v2250, %v2249
    %v2279 = vpack.c.b16 %v2252, %v2251
    %v2280 = vpack.c.b16 %v2254, %v2253
    %v2281 = vpack.c.b16 %v2256, %v2255
    %v2282 = vpack.c.b16 %v2258, %v2257
    %v2283 = vpack.c.b16 %v2260, %v2259
    %v2284 = vpack.c.b16 %v2262, %v2261
    %v2285 = vpack.c.b16 %v2264, %v2263
    %v2286 = vpack.c.b16 %v2266, %v2265
    %v2287 = vpack.c.b16 %v2268, %v2267
    %v2288 = vpack.c.b16 %v2270, %v2269
    %v2289 = vpack.c.b16 %v2272, %v2271
    %v2290 = vpack.c.b16 %v2274, %v2273
    %2307 = vmatprep.subr.bf16.mxu0 0
    %2308 = vmatpush1.bf16.msra.mxu0 %v2275
    %2309 = vmatprep.subr.bf16.mxu0 0
    %2310 = vmatpush1.bf16.msra.mxu0 %v2276
    %2311 = vmatprep.subr.bf16.mxu0 0
    %2312 = vmatpush1.bf16.msra.mxu0 %v2277
    %2313 = vmatprep.subr.bf16.mxu0 0
    %2314 = vmatpush1.bf16.msra.mxu0 %v2278
    %2315 = vmatprep.subr.bf16.mxu0 0
    %2316 = vmatpush1.bf16.msra.mxu0 %v2279
    %2317 = vmatprep.subr.bf16.mxu0 0
    %2318 = vmatpush1.bf16.msra.mxu0 %v2280
    %2319 = vmatprep.subr.bf16.mxu0 0
    %2320 = vmatpush1.bf16.msra.mxu0 %v2281
    %2321 = vmatprep.subr.bf16.mxu0 0
    %2322 = vmatpush1.bf16.msra.mxu0 %v2282
    %2323 = vmatprep.subr.bf16.mxu0 0
    %2324 = vmatpush1.bf16.msra.mxu0 %v2283
    %2325 = vmatprep.subr.bf16.mxu0 0
    %2326 = vmatpush1.bf16.msra.mxu0 %v2284
    %2327 = vmatprep.subr.bf16.mxu0 0
    %2328 = vmatpush1.bf16.msra.mxu0 %v2285
    %2329 = vmatprep.subr.bf16.mxu0 0
    %2330 = vmatpush1.bf16.msra.mxu0 %v2286
    %2331 = vmatprep.subr.bf16.mxu0 0
    %2332 = vmatpush1.bf16.msra.mxu0 %v2287
    %2333 = vmatprep.subr.bf16.mxu0 0
    %2334 = vmatpush1.bf16.msra.mxu0 %v2288
    %2335 = vmatprep.subr.bf16.mxu0 0
    %2336 = vmatpush1.bf16.msra.mxu0 %v2289
    %2337 = vmatprep.subr.bf16.mxu0 0
    %2338 = vmatpush1.bf16.msra.mxu0 %v2290
    %2339 = vmatprep.mubr.bf16.mxu0 %v2171
    %2340 = vmatmul.mubr.bf16.gmra.mrb[0].mxu0 %v2170
    %v2341 = vpop.f32.mrb[0].mxu0
    %v2342 = vadd.f32 %v2209, %v2341
    %v2343 = vpop.f32.mrb[0].mxu0
    %v2344 = vpop.f32.mrb[0].mxu0
    %v2345 = vadd.f32 %v2209, %v2344
    %v2346 = vpop.f32.mrb[0].mxu0
    %2347 = vdwg.mxu0
    %2348 = vmax.xlane.f32.xlu0 %v2342
    %v2349 = vpop.xlane.xlu0 %2348
    %2350 = vmax.xlane.f32.xlu0 %v2345
    %v2351 = vpop.xlane.xlu0 %2350
    %v2352 = vsub.f32 %v2342, %v2349
    %v2353 = vsub.f32 %v2345, %v2351
    %v2354 = vmul.f32 %v2352, 1.442695
    %v2355 = vpow.pop %v2354
    %v2356 = vmul.f32 %v2353, 1.442695
    %v2357 = vpow.pop %v2356
    %2358 = vadd.xlane.f32.xlu0 %v2355
    %v2359 = vpop.xlane.xlu0 %2358
    %2360 = vadd.xlane.f32.xlu0 %v2357
    %v2361 = vpop.xlane.xlu0 %2360
    %v2362 = vlog2.pop %v2359
    %v2363 = vmul.f32 %v2362, 0.6931472
    %v2364 = vlog2.pop %v2361
    %v2365 = vmul.f32 %v2364, 0.6931472
    %v2366 = vsub.f32 %v2352, %v2363
    %v2367 = vsub.f32 %v2353, %v2365
    %2368 = vst [vmem:[#allocation10] sm:$0xff] %v2366
    %2369 = vst [vmem:[#allocation10 + $0x8] sm:$0xff] %v2367
    // Predicated region
    $region46: #{tpu_custom_call.1} parent=1 // pred_check
      _
    $region47: #{tpu_custom_call.1} parent=1 // pred_check_branch
      %2371 = sbr.rel (0) target = $region49
    $region48: #{tpu_custom_call.1} parent=1 // pred_region
      %s2373 = ssub.s32 256, 256
      %2374 = vsyncadd [#allocation4], %s2373
      %s2375 = sshll.u32 [#allocation10], 4
      %s2376 = int_to_ptr.vmem [resolvable:$true] %s2375
      %2381 = dma.vmem_to_hbm [thread:$0]  %s2376, 256, %s7, [#allocation4], 128, 128, 8
    $region49: #{tpu_custom_call.1} parent=1 // pred_fallthru
      _
    // Predicated region
    $region50: #{tpu_custom_call.1} parent=1 // pred_check
      _
    $region51: #{tpu_custom_call.1} parent=1 // pred_check_branch
      %2383 = sbr.rel (0) target = $region53
    $region52: #{tpu_custom_call.1} parent=1 // pred_region
      %2384 = dma.done [#allocation4], 256
    $region53: #{tpu_custom_call.1} parent=1 // pred_fallthru
      _
    %2385 = vsyncpa [#allocation3], 1
    %2386 = vsyncpa [#allocation6], 1
    %2387 = vsyncpa [#allocation9], 1
    %2388 = vsyncpa [#allocation4], 1

</llo_original>
